<compile_context>
chip_gen: v7x
topology: tpu7x:2x2x1
jax: 0.10.0
libtpu: 0.0.40
codegen_flags: <defaults>
</compile_context>

<pallas_src>
import functools

import jax
import jax.numpy as jnp
from jax.experimental import pallas as pl
from jax.experimental.pallas import tpu as pltpu


def _attention_kernel(x_ref, wqkv_ref, wout_ref, o_ref, *, heads, dim_head):
    # x_ref:    (1, N, D)      current batch element
    # wqkv_ref: (3*H, D, Dh)   head-major qkv weights [q heads | k heads | v heads]
    # wout_ref: (H, Dh, D)     head-major output-projection weights
    # o_ref:    (1, N, D)
    scale = dim_head ** (-0.5)

    x = x_ref[0]                                             # (N, D) f32
    n, d = x.shape

    # --- QKV projection: one batched MXU einsum over all 3*H head slices ----
    x_b = jnp.broadcast_to(x.astype(jnp.bfloat16), (3 * heads, n, d))
    qkv = jnp.einsum('hnd,hdk->hnk', x_b, wqkv_ref[...].astype(jnp.bfloat16),
                     preferred_element_type=jnp.float32)     # (3H, N, Dh) f32

    # Leading-axis slices are cheap (tile selection, no lane masking).
    q = (qkv[:heads] * scale).astype(jnp.bfloat16)           # scale folded into q
    k = qkv[heads:2 * heads].astype(jnp.bfloat16)
    v = qkv[2 * heads:].astype(jnp.bfloat16)

    # --- scaled-dot-product attention, all heads batched ---------------------
    dots = jnp.einsum('hnd,hmd->hnm', q, k,
                      preferred_element_type=jnp.float32)    # (H, N, N) f32
    dots = dots - jnp.max(dots, axis=-1, keepdims=True)      # stable softmax (f32)
    e = jnp.exp(dots)
    attn = e * pl.reciprocal(jnp.sum(e, axis=-1, keepdims=True), approx=True)

    out_h = jnp.einsum('hnm,hmd->hnd', attn.astype(jnp.bfloat16), v,
                       preferred_element_type=jnp.float32)   # (H, N, Dh) f32

    # --- output projection: batched per-head matmul + leading-axis reduction -
    # (== concat(heads) @ W_out, without relayouting out_h to (N, H*Dh))
    proj = jnp.einsum('hnd,hdk->hnk', out_h.astype(jnp.bfloat16),
                      wout_ref[...].astype(jnp.bfloat16),
                      preferred_element_type=jnp.float32)    # (H, N, D) f32
    o_ref[0] = jnp.sum(proj, axis=0).astype(o_ref.dtype)

    # TODO(synk): mask branch (F.pad + masked_fill) not implemented; forward uses mask=None.
    # TODO(synk): for large N, add a KV grid axis (last, "arbitrary") with online-softmax
    # (flash) accumulators in pltpu.VMEM scratch so the (N,N) dots never materializes;
    # re-derive q/kv tile sizes for v7x's 64 MiB VMEM and set vmem_limit_bytes explicitly.


def attention_forward(x, w_qkv, w_out, *, heads, dim_head):
    """x: (B, N, D) f32. w_qkv: (D, 3*heads*dim_head). w_out: (heads*dim_head, D)."""
    b, n, d = x.shape
    inner = heads * dim_head
    assert w_qkv.shape == (d, 3 * inner) and w_out.shape == (inner, d)

    # Repack weights head-major OUTSIDE the kernel (free, fused by XLA):
    #   (D, 3*H*Dh) columns ordered (qkv, head, dh)  ->  (3H, D, Dh)
    w_qkv3 = jnp.transpose(w_qkv.reshape(d, 3 * heads, dim_head), (1, 0, 2))
    #   (H*Dh, D) rows ordered (head, dh)            ->  (H, Dh, D)
    w_out3 = w_out.reshape(heads, dim_head, d)

    kernel = functools.partial(_attention_kernel, heads=heads, dim_head=dim_head)

    return pl.pallas_call(
        kernel,
        out_shape=jax.ShapeDtypeStruct((b, n, d), x.dtype),
        grid_spec=pltpu.PrefetchScalarGridSpec(
            num_scalar_prefetch=0,
            grid=(b,),  # batch axis stays "parallel" (v7x megacore: >=2 steps)
            in_specs=[
                pl.BlockSpec((1, n, d), lambda i: (i, 0, 0)),
                # Constant index_map -> weight blocks stay resident across steps.
                pl.BlockSpec((3 * heads, d, dim_head), lambda i: (0, 0, 0)),
                pl.BlockSpec((heads, dim_head, d), lambda i: (0, 0, 0)),
            ],
            out_specs=pl.BlockSpec((1, n, d), lambda i: (i, 0, 0)),
        ),
        compiler_params=pltpu.CompilerParams(
            dimension_semantics=("parallel",),
        ),
    )(x, w_qkv3, w_out3)


def _reference(x, w_qkv, w_out, heads, dim_head):
    # Pure-JAX f32 reference mirroring the PyTorch forward (mask=None, eval dropout).
    b, n, d = x.shape
    inner = heads * dim_head
    qkv = x @ w_qkv                                          # (B, N, 3*inner)
    q, k, v = jnp.split(qkv, 3, axis=-1)

    def to_heads(t):
        return t.reshape(b, n, heads, dim_head).transpose(0, 2, 1, 3)  # (B,H,N,Dh)

    q, k, v = map(to_heads, (q, k, v))
    dots = jnp.einsum('bhid,bhjd->bhij', q, k) * (dim_head ** -0.5)
    attn = jax.nn.softmax(dots, axis=-1)
    out = jnp.einsum('bhij,bhjd->bhid', attn, v)
    out = out.transpose(0, 2, 1, 3).reshape(b, n, inner)
    return out @ w_out


if __name__ == "__main__":
    # Small shapes consistent with the module.
    B, N, DIM = 2, 8, 32
    HEADS, DIM_HEAD = 4, 8
    INNER = HEADS * DIM_HEAD
    # dropout=0.1 in __init__ but forward here is eval-mode -> identity.

    key = jax.random.PRNGKey(0)
    kx, kq, ko = jax.random.split(key, 3)
    x = jax.random.normal(kx, (B, N, DIM), dtype=jnp.float32)
    # Deterministic parameter init (Linear, bias=False): uniform(-1/sqrt(in), 1/sqrt(in))
    w_qkv = jax.random.uniform(kq, (DIM, 3 * INNER), dtype=jnp.float32,
                               minval=-(DIM ** -0.5), maxval=DIM ** -0.5)
    w_out = jax.random.uniform(ko, (INNER, DIM), dtype=jnp.float32,
                               minval=-(INNER ** -0.5), maxval=INNER ** -0.5)

    out = attention_forward(x, w_qkv, w_out, heads=HEADS, dim_head=DIM_HEAD)
    out = jax.block_until_ready(out)

    ref = _reference(x, w_qkv, w_out, HEADS, DIM_HEAD)
    assert out.shape == (B, N, DIM)
    # bf16 MXU operands (f32 accumulate) + approx reciprocal -> loosened tolerance.
    assert jnp.allclose(out, ref, atol=3e-2, rtol=3e-2), "mismatch vs reference"
    print("KERNEL_OK")
</pallas_src>

<mosaic_0001>
module attributes {stable_mosaic.version = 11 : i64} {
  func.func @_attention_kernel(%arg0: i32, %arg1: memref<1x8x32xf32, #tpu.memory_space<vmem>>, %arg2: memref<12x32x8xf32, #tpu.memory_space<vmem>>, %arg3: memref<4x8x32xf32, #tpu.memory_space<vmem>>, %arg4: memref<1x8x32xf32, #tpu.memory_space<vmem>>) attributes {dimension_semantics = [#tpu.dimension_semantics<parallel>], iteration_bounds = array<i64: 2>, scalar_prefetch = 0 : i64, scratch_operands = 0 : i64, tpu.core_type = #tpu.core_type<tc>, window_params = [{transform_indices = @transform_0, window_bounds = array<i64: 1, 8, 32>}, {pipeline_mode = #tpu.pipeline_mode<synchronous>, transform_indices = @transform_1, window_bounds = array<i64: 12, 32, 8>}, {pipeline_mode = #tpu.pipeline_mode<synchronous>, transform_indices = @transform_2, window_bounds = array<i64: 4, 8, 32>}, {transform_indices = @transform_3, window_bounds = array<i64: 1, 8, 32>}]} {
    %c0 = arith.constant 0 : index
    %c0_0 = arith.constant 0 : index
    %c0_1 = arith.constant 0 : index
    %0 = vector.load %arg1[%c0, %c0_0, %c0_1] : memref<1x8x32xf32, #tpu.memory_space<vmem>>, vector<1x8x32xf32>
    %1 = vector.shape_cast %0 : vector<1x8x32xf32> to vector<8x32xf32>
    %2 = arith.truncf %1 : vector<8x32xf32> to vector<8x32xbf16>
    %3 = vector.shape_cast %2 : vector<8x32xbf16> to vector<1x8x32xbf16>
    %4 = vector.broadcast %3 : vector<1x8x32xbf16> to vector<12x8x32xbf16>
    %c0_2 = arith.constant 0 : index
    %c0_3 = arith.constant 0 : index
    %c0_4 = arith.constant 0 : index
    %5 = vector.load %arg2[%c0_2, %c0_3, %c0_4] : memref<12x32x8xf32, #tpu.memory_space<vmem>>, vector<12x32x8xf32>
    %6 = arith.truncf %5 : vector<12x32x8xf32> to vector<12x32x8xbf16>
    "tpu.trace_start"() <{level = 10 : i32, message = "hnd,hdk->hnk"}> : () -> ()
    %cst = arith.constant dense<0.000000e+00> : vector<12x8x8xf32>
    %7 = tpu.matmul %4, %6, %cst {dimension_numbers = #tpu.dot_dimension_numbers<[2], [1], [1], [2], [0, 0, 0, 1, 1, 2], [0], [0]>} : vector<12x8x32xbf16>, vector<12x32x8xbf16>, vector<12x8x8xf32> -> vector<12x8x8xf32>
    "tpu.trace_stop"() : () -> ()
    %8 = vector.extract_strided_slice %7 {offsets = [0, 0, 0], sizes = [4, 8, 8], strides = [1, 1, 1]} : vector<12x8x8xf32> to vector<4x8x8xf32>
    %cst_5 = arith.constant 0.353553385 : f32
    %9 = vector.broadcast %cst_5 : f32 to vector<4x8x8xf32>
    %10 = arith.mulf %8, %9 : vector<4x8x8xf32>
    %11 = arith.truncf %10 : vector<4x8x8xf32> to vector<4x8x8xbf16>
    %12 = vector.extract_strided_slice %7 {offsets = [4, 0, 0], sizes = [4, 8, 8], strides = [1, 1, 1]} : vector<12x8x8xf32> to vector<4x8x8xf32>
    %13 = arith.truncf %12 : vector<4x8x8xf32> to vector<4x8x8xbf16>
    %14 = vector.extract_strided_slice %7 {offsets = [8, 0, 0], sizes = [4, 8, 8], strides = [1, 1, 1]} : vector<12x8x8xf32> to vector<4x8x8xf32>
    %15 = arith.truncf %14 : vector<4x8x8xf32> to vector<4x8x8xbf16>
    "tpu.trace_start"() <{level = 10 : i32, message = "hnd,hmd->hnm"}> : () -> ()
    %cst_6 = arith.constant dense<0.000000e+00> : vector<4x8x8xf32>
    %16 = tpu.matmul %11, %13, %cst_6 {dimension_numbers = #tpu.dot_dimension_numbers<[2], [2], [1], [1], [0, 0, 0, 1, 1, 1], [0], [0]>} : vector<4x8x8xbf16>, vector<4x8x8xbf16>, vector<4x8x8xf32> -> vector<4x8x8xf32>
    "tpu.trace_stop"() : () -> ()
    %cst_7 = arith.constant dense<0xFF800000> : vector<4x8xf32>
    %17 = vector.multi_reduction <maximumf>, %16, %cst_7 [2] : vector<4x8x8xf32> to vector<4x8xf32>
    %18 = vector.shape_cast %17 : vector<4x8xf32> to vector<4x8x1xf32>
    %19 = vector.broadcast %18 : vector<4x8x1xf32> to vector<4x8x8xf32>
    %20 = arith.subf %16, %19 : vector<4x8x8xf32>
    %21 = math.exp %20 : vector<4x8x8xf32>
    %cst_8 = arith.constant dense<0.000000e+00> : vector<4x8xf32>
    %22 = vector.multi_reduction <add>, %21, %cst_8 [2] : vector<4x8x8xf32> to vector<4x8xf32>
    %23 = vector.shape_cast %22 : vector<4x8xf32> to vector<4x8x1xf32>
    %24 = tpu.reciprocal %23 {approx = true} : vector<4x8x1xf32> -> vector<4x8x1xf32>
    %25 = vector.broadcast %24 : vector<4x8x1xf32> to vector<4x8x8xf32>
    %26 = arith.mulf %21, %25 : vector<4x8x8xf32>
    %27 = arith.truncf %26 : vector<4x8x8xf32> to vector<4x8x8xbf16>
    "tpu.trace_start"() <{level = 10 : i32, message = "hnm,hmd->hnd"}> : () -> ()
    %cst_9 = arith.constant dense<0.000000e+00> : vector<4x8x8xf32>
    %28 = tpu.matmul %27, %15, %cst_9 {dimension_numbers = #tpu.dot_dimension_numbers<[2], [1], [1], [2], [0, 0, 0, 1, 1, 2], [0], [0]>} : vector<4x8x8xbf16>, vector<4x8x8xbf16>, vector<4x8x8xf32> -> vector<4x8x8xf32>
    "tpu.trace_stop"() : () -> ()
    %29 = arith.truncf %28 : vector<4x8x8xf32> to vector<4x8x8xbf16>
    %c0_10 = arith.constant 0 : index
    %c0_11 = arith.constant 0 : index
    %c0_12 = arith.constant 0 : index
    %30 = vector.load %arg3[%c0_10, %c0_11, %c0_12] : memref<4x8x32xf32, #tpu.memory_space<vmem>>, vector<4x8x32xf32>
    %31 = arith.truncf %30 : vector<4x8x32xf32> to vector<4x8x32xbf16>
    "tpu.trace_start"() <{level = 10 : i32, message = "hnd,hdk->hnk"}> : () -> ()
    %cst_13 = arith.constant dense<0.000000e+00> : vector<4x8x32xf32>
    %32 = tpu.matmul %29, %31, %cst_13 {dimension_numbers = #tpu.dot_dimension_numbers<[2], [1], [1], [2], [0, 0, 0, 1, 1, 2], [0], [0]>} : vector<4x8x8xbf16>, vector<4x8x32xbf16>, vector<4x8x32xf32> -> vector<4x8x32xf32>
    "tpu.trace_stop"() : () -> ()
    %cst_14 = arith.constant dense<0.000000e+00> : vector<8x32xf32>
    %33 = vector.multi_reduction <add>, %32, %cst_14 [0] : vector<4x8x32xf32> to vector<8x32xf32>
    %c0_15 = arith.constant 0 : index
    %c0_16 = arith.constant 0 : index
    %c0_17 = arith.constant 0 : index
    %34 = vector.load %arg4[%c0_15, %c0_16, %c0_17] : memref<1x8x32xf32, #tpu.memory_space<vmem>>, vector<1x8x32xf32>
    %35 = vector.shape_cast %34 : vector<1x8x32xf32> to vector<8x32xf32>
    %36 = vector.shape_cast %33 : vector<8x32xf32> to vector<1x8x32xf32>
    tpu.vector_store %arg4[%c0_15, %c0_16, %c0_17], %36 {strides = array<i32>} : memref<1x8x32xf32, #tpu.memory_space<vmem>>, vector<1x8x32xf32>,
    return
  }
  func.func @transform_0(%arg0: i32) -> (i32, i32, i32) {
    %c0_i32 = arith.constant 0 : i32
    %c0_i32_0 = arith.constant 0 : i32
    %c0_i32_1 = arith.constant 0 : i32
    return %arg0, %c0_i32, %c0_i32_0 : i32, i32, i32
  }
  func.func @transform_1(%arg0: i32) -> (i32, i32, i32) {
    %c0_i32 = arith.constant 0 : i32
    %c0_i32_0 = arith.constant 0 : i32
    %c0_i32_1 = arith.constant 0 : i32
    %c0_i32_2 = arith.constant 0 : i32
    return %c0_i32, %c0_i32_0, %c0_i32_1 : i32, i32, i32
  }
  func.func @transform_2(%arg0: i32) -> (i32, i32, i32) {
    %c0_i32 = arith.constant 0 : i32
    %c0_i32_0 = arith.constant 0 : i32
    %c0_i32_1 = arith.constant 0 : i32
    %c0_i32_2 = arith.constant 0 : i32
    return %c0_i32, %c0_i32_0, %c0_i32_1 : i32, i32, i32
  }
  func.func @transform_3(%arg0: i32) -> (i32, i32, i32) {
    %c0_i32 = arith.constant 0 : i32
    %c0_i32_0 = arith.constant 0 : i32
    %c0_i32_1 = arith.constant 0 : i32
    return %arg0, %c0_i32, %c0_i32_0 : i32, i32, i32
  }
}

</mosaic_0001>

<llo_original>
// kernel: tpu_custom_call.1
$region0: #{tpu_custom_call.1}
  #allocation0 [shape = 'u32[]', space=smem, size = 0x4, offset = 0x4, fixed_abs, tag = 'smem constant byte address 0x4 - core index']
  #allocation1 [shape = 'u32[144,128]{1,0:T(1,128)}', space=vmem, size = 0x12000, scoped, tag = 'internal scratch']
  %s0 = inlined_call_operand.vmem [shape: f32[2,8,32], index: 0, kind: input, shape index: {}]
  %s1 = inlined_call_operand.vmem [shape: f32[12,32,8], index: 1, kind: input, shape index: {}]
  %s2 = inlined_call_operand.vmem [shape: f32[4,8,32], index: 2, kind: input, shape index: {}]
  %s3 = inlined_call_operand.hbm [shape: f32[2,8,32], index: 3, kind: output, shape index: {}]
  %s4 = sld [smem:[#allocation0]]
  $region45: #{tpu_custom_call.1} parent=0
    _
  %s6 = ssub.s32 1, %s4
  %s7 = scalar_select 0, %s6, %s4
  $region1: #{tpu_custom_call.1} parent=0
    #allocation2 [shape = 'u8[8192]{0}', space=vmem, size = 0x2000, scoped, tag = 'output window, operand 0']
    #allocation3 [shape = 's32[2]{0}', space=sflag, size = 0x8, scoped, tag = 'scoped memory for tpu_custom_call.1']
    %8 = vsyncpa [#allocation3], 0
    %s9 = scalar_lea.sflag [#allocation3], 1
    %10 = vsyncpa %s9, 0
    loop: start=0, step=1, limit=4
    $region2: #{tpu_custom_call.1} parent=1 // loop_pre_header
      _
    $region3: #{tpu_custom_call.1} parent=1 // loop_header
      %s12 = sphi 0, %s16
      %p13 = scmp.ge.s32.totalorder %s12, 4
      %s22 = sphi 0, %s24
      %s25 = sphi 0, %s22
      %s26 = sphi 0, %s25
      %s42 = sphi 0, %s26
      %s46 = sphi 0, %s46
      %s48 = sphi 0, %s46
      %s49 = sphi 0, %s48
      %s63 = sphi 0, %s49
      %s67 = sphi 0, %s67
      %s69 = sphi 0, %s67
      %s70 = sphi 0, %s69
      %s84 = sphi 0, %s70
      %s90 = sphi 0, %s92
      %s93 = sphi 0, %s90
      %s94 = sphi 0, %s93
      %s110 = sphi 0, %s94
    $region4: #{tpu_custom_call.1} parent=1 // loop_header_branch
      %15 = sbr.rel (%p13) target = $region8
    $region5: #{tpu_custom_call.1} parent=1 // loop_body
      %s17 = ssub.s32 %s12, 1
      %s18 = ssub.s32 %s12, 2
      %s19 = sadd.s32 %s12, 1
      %s20 = ssub.s32 %s12, %s19
      %p21 = scmp.eq.s32.totalorder %s20, 0
      %s23 = sadd.s32 %s22, 1
      %s24 = scalar_select %p21, %s22, %s23
      %p27 = pneg %p21
      %p28 = scmp.eq.s32.totalorder %s12, 1
      %p29 = por %p27, %p28
      %p30 = scmp.ne.s32.totalorder %s22, %s25
      %p31 = scmp.eq.s32.totalorder %s12, 0
      %p32 = por %p30, %p31
      %p33 = scmp.ne.s32.totalorder %s22, %s25
      %p34 = scmp.eq.s32.totalorder %s17, 1
      %p35 = por %p33, %p34
      %p36 = scmp.ne.s32.totalorder %s25, %s26
      %p37 = scmp.eq.s32.totalorder %s17, 0
      %p38 = por %p36, %p37
      %p39 = scmp.ne.s32.totalorder %s25, %s26
      %p40 = scmp.eq.s32.totalorder %s18, 1
      %p41 = por %p39, %p40
      %p43 = scmp.ne.s32.totalorder %s26, %s42
      %p44 = scmp.eq.s32.totalorder %s18, 0
      %p45 = por %p43, %p44
      %s47 = sadd.s32 %s46, 1
      %p50 = scmp.eq.s32.totalorder %s12, 1
      %p51 = scmp.ne.s32.totalorder %s46, %s48
      %p52 = scmp.eq.s32.totalorder %s12, 0
      %p53 = por %p51, %p52
      %p54 = scmp.ne.s32.totalorder %s46, %s48
      %p55 = scmp.eq.s32.totalorder %s17, 1
      %p56 = por %p54, %p55
      %p57 = scmp.ne.s32.totalorder %s48, %s49
      %p58 = scmp.eq.s32.totalorder %s17, 0
      %p59 = por %p57, %p58
      %p60 = scmp.ne.s32.totalorder %s48, %s49
      %p61 = scmp.eq.s32.totalorder %s18, 1
      %p62 = por %p60, %p61
      %p64 = scmp.ne.s32.totalorder %s49, %s63
      %p65 = scmp.eq.s32.totalorder %s18, 0
      %p66 = por %p64, %p65
      %s68 = sadd.s32 %s67, 1
      %p71 = scmp.eq.s32.totalorder %s12, 1
      %p72 = scmp.ne.s32.totalorder %s67, %s69
      %p73 = scmp.eq.s32.totalorder %s12, 0
      %p74 = por %p72, %p73
      %p75 = scmp.ne.s32.totalorder %s67, %s69
      %p76 = scmp.eq.s32.totalorder %s17, 1
      %p77 = por %p75, %p76
      %p78 = scmp.ne.s32.totalorder %s69, %s70
      %p79 = scmp.eq.s32.totalorder %s17, 0
      %p80 = por %p78, %p79
      %p81 = scmp.ne.s32.totalorder %s69, %s70
      %p82 = scmp.eq.s32.totalorder %s18, 1
      %p83 = por %p81, %p82
      %p85 = scmp.ne.s32.totalorder %s70, %s84
      %p86 = scmp.eq.s32.totalorder %s18, 0
      %p87 = por %p85, %p86
      %s88 = ssub.s32 %s12, %s19
      %p89 = scmp.eq.s32.totalorder %s88, 0
      %s91 = sadd.s32 %s90, 1
      %s92 = scalar_select %p89, %s90, %s91
      %p95 = pneg %p89
      %p96 = scmp.eq.s32.totalorder %s12, 1
      %p97 = por %p95, %p96
      %p98 = scmp.ne.s32.totalorder %s90, %s93
      %p99 = scmp.eq.s32.totalorder %s12, 0
      %p100 = por %p98, %p99
      %p101 = scmp.ne.s32.totalorder %s90, %s93
      %p102 = scmp.eq.s32.totalorder %s17, 1
      %p103 = por %p101, %p102
      %p104 = scmp.ne.s32.totalorder %s93, %s94
      %p105 = scmp.eq.s32.totalorder %s17, 0
      %p106 = por %p104, %p105
      %p107 = scmp.ne.s32.totalorder %s93, %s94
      %p108 = scmp.eq.s32.totalorder %s18, 1
      %p109 = por %p107, %p108
      %p111 = scmp.ne.s32.totalorder %s94, %s110
      %p112 = scmp.eq.s32.totalorder %s18, 0
      %p113 = por %p111, %p112
      %p114 = scmp.le.s32.totalorder 1, %s12
      %p115 = scmp.lt.s32.totalorder %s12, 3
      %p116 = pnand %p114, %p115
      %p117 = pneg %p116
      // Predicated region
      $region9: #{tpu_custom_call.1} parent=5 // pred_check
        _
      $region10: #{tpu_custom_call.1} parent=5 // pred_check_branch
        %119 = sbr.rel (%p116) target = $region12
      $region11: #{tpu_custom_call.1} parent=5 // pred_region
        %s120 = ssub.s32 %s12, 1
        // Predicated region
        $region13: #{tpu_custom_call.1} parent=11 // pred_check
          %p121 = pneg %p59
        $region14: #{tpu_custom_call.1} parent=11 // pred_check_branch
          %123 = sbr.rel (%p121) target = $region16
        $region15: #{tpu_custom_call.1} parent=11 // pred_region
          _
        $region16: #{tpu_custom_call.1} parent=11 // pred_fallthru
          _
        // Predicated region
        $region17: #{tpu_custom_call.1} parent=11 // pred_check
          %p124 = pneg %p80
        $region18: #{tpu_custom_call.1} parent=11 // pred_check_branch
          %126 = sbr.rel (%p124) target = $region20
        $region19: #{tpu_custom_call.1} parent=11 // pred_region
          _
        $region20: #{tpu_custom_call.1} parent=11 // pred_fallthru
          _
      $region12: #{tpu_custom_call.1} parent=5 // pred_fallthru
        _
      %p127 = scmp.lt.s32.totalorder %s12, 2
      // Predicated region
      $region21: #{tpu_custom_call.1} parent=5 // pred_check
        %p128 = pneg %p127
      $region22: #{tpu_custom_call.1} parent=5 // pred_check_branch
        %130 = sbr.rel (%p128) target = $region24
      $region23: #{tpu_custom_call.1} parent=5 // pred_region
        // Predicated region
        $region25: #{tpu_custom_call.1} parent=23 // pred_check
          %p131 = pneg %p32
        $region26: #{tpu_custom_call.1} parent=23 // pred_check_branch
          %133 = sbr.rel (%p131) target = $region28
        $region27: #{tpu_custom_call.1} parent=23 // pred_region
          %p134 = scmp.lt.s32.totalorder %s12, 1
          %s135 = scalar_select %p134, %s12, 1
          %s136 = smul.addr %s135, 8
          %s137 = scalar_lea.vmem %s0, %s136
        $region28: #{tpu_custom_call.1} parent=23 // pred_fallthru
          _
      $region24: #{tpu_custom_call.1} parent=5 // pred_fallthru
        _
      %p138 = scmp.le.s32.totalorder 1, %s12
      %p139 = scmp.lt.s32.totalorder %s12, 3
      %p140 = pnand %p138, %p139
      %p141 = pneg %p140
      // Predicated region
      $region29: #{tpu_custom_call.1} parent=5 // pred_check
        _
      $region30: #{tpu_custom_call.1} parent=5 // pred_check_branch
        %143 = sbr.rel (%p140) target = $region32
      $region31: #{tpu_custom_call.1} parent=5 // pred_region
        %s144 = ssub.s32 %s12, 1
        %p145 = scmp.lt.s32.totalorder %s17, 1
        %s146 = scalar_select %p145, %s17, 1
        %s147 = smul.addr %s146, 8
        %s148 = scalar_lea.vmem %s0, %s147
        %p149 = pneg %p38
        %p150 = pneg %p35
        %p151 = pneg %p59
        %p152 = pneg %p56
        %p153 = pneg %p80
        %p154 = pneg %p77
        %p155 = pneg %p106
        %p156 = pneg %p103
        %s157 = sand.u32 %s93, 1
        %s158 = scalar_lea.sflag [#allocation3], %s157
        %s159 = sand.u32 %s93, 1
        %s160 = smul.addr %s159, 8
        %s161 = scalar_lea.vmem [#allocation2], %s160
        %p162 = scmp.lt.s32.totalorder %s17, 1
        %s163 = scalar_select %p162, %s17, 1
        %s164 = smul.addr %s163, 8
        %s165 = scalar_lea.vmem %s0, %s164
        %v167 = vld [vmem:[%s165] sm:$0xff]
        %v168 = vpack.c.bf16 %v167, %v167
        %v169 = vld [vmem:[%s1] sm:$0xff]
        %v170 = vld [vmem:[%s1 + $0x8] sm:$0xff]
        %v171 = vld [vmem:[%s1 + $0x10] sm:$0xff]
        %v172 = vld [vmem:[%s1 + $0x18] sm:$0xff]
        %v173 = vld [vmem:[%s1 + $0x20] sm:$0xff]
        %v174 = vld [vmem:[%s1 + $0x28] sm:$0xff]
        %v175 = vld [vmem:[%s1 + $0x30] sm:$0xff]
        %v176 = vld [vmem:[%s1 + $0x38] sm:$0xff]
        %v177 = vld [vmem:[%s1 + $0x40] sm:$0xff]
        %v178 = vld [vmem:[%s1 + $0x48] sm:$0xff]
        %v179 = vld [vmem:[%s1 + $0x50] sm:$0xff]
        %v180 = vld [vmem:[%s1 + $0x58] sm:$0xff]
        %v181 = vld [vmem:[%s1 + $0x60] sm:$0xff]
        %v182 = vld [vmem:[%s1 + $0x68] sm:$0xff]
        %v183 = vld [vmem:[%s1 + $0x70] sm:$0xff]
        %v184 = vld [vmem:[%s1 + $0x78] sm:$0xff]
        %v185 = vld [vmem:[%s1 + $0x80] sm:$0xff]
        %v186 = vld [vmem:[%s1 + $0x88] sm:$0xff]
        %v187 = vld [vmem:[%s1 + $0x90] sm:$0xff]
        %v188 = vld [vmem:[%s1 + $0x98] sm:$0xff]
        %v189 = vld [vmem:[%s1 + $0xa0] sm:$0xff]
        %v190 = vld [vmem:[%s1 + $0xa8] sm:$0xff]
        %v191 = vld [vmem:[%s1 + $0xb0] sm:$0xff]
        %v192 = vld [vmem:[%s1 + $0xb8] sm:$0xff]
        %v193 = vld [vmem:[%s1 + $0xc0] sm:$0xff]
        %v194 = vld [vmem:[%s1 + $0xc8] sm:$0xff]
        %v195 = vld [vmem:[%s1 + $0xd0] sm:$0xff]
        %v196 = vld [vmem:[%s1 + $0xd8] sm:$0xff]
        %v197 = vld [vmem:[%s1 + $0xe0] sm:$0xff]
        %v198 = vld [vmem:[%s1 + $0xe8] sm:$0xff]
        %v199 = vld [vmem:[%s1 + $0xf0] sm:$0xff]
        %v200 = vld [vmem:[%s1 + $0xf8] sm:$0xff]
        %v201 = vld [vmem:[%s1 + $0x100] sm:$0xff]
        %v202 = vld [vmem:[%s1 + $0x108] sm:$0xff]
        %v203 = vld [vmem:[%s1 + $0x110] sm:$0xff]
        %v204 = vld [vmem:[%s1 + $0x118] sm:$0xff]
        %v205 = vld [vmem:[%s1 + $0x120] sm:$0xff]
        %v206 = vld [vmem:[%s1 + $0x128] sm:$0xff]
        %v207 = vld [vmem:[%s1 + $0x130] sm:$0xff]
        %v208 = vld [vmem:[%s1 + $0x138] sm:$0xff]
        %v209 = vld [vmem:[%s1 + $0x140] sm:$0xff]
        %v210 = vld [vmem:[%s1 + $0x148] sm:$0xff]
        %v211 = vld [vmem:[%s1 + $0x150] sm:$0xff]
        %v212 = vld [vmem:[%s1 + $0x158] sm:$0xff]
        %v213 = vld [vmem:[%s1 + $0x160] sm:$0xff]
        %v214 = vld [vmem:[%s1 + $0x168] sm:$0xff]
        %v215 = vld [vmem:[%s1 + $0x170] sm:$0xff]
        %v216 = vld [vmem:[%s1 + $0x178] sm:$0xff]
        %v217 = vpack.c.bf16 %v170, %v169
        %v218 = vpack.c.bf16 %v172, %v171
        %v219 = vpack.c.bf16 %v174, %v173
        %v220 = vpack.c.bf16 %v176, %v175
        %v221 = vpack.c.bf16 %v178, %v177
        %v222 = vpack.c.bf16 %v180, %v179
        %v223 = vpack.c.bf16 %v182, %v181
        %v224 = vpack.c.bf16 %v184, %v183
        %v225 = vpack.c.bf16 %v186, %v185
        %v226 = vpack.c.bf16 %v188, %v187
        %v227 = vpack.c.bf16 %v190, %v189
        %v228 = vpack.c.bf16 %v192, %v191
        %v229 = vpack.c.bf16 %v194, %v193
        %v230 = vpack.c.bf16 %v196, %v195
        %v231 = vpack.c.bf16 %v198, %v197
        %v232 = vpack.c.bf16 %v200, %v199
        %v233 = vpack.c.bf16 %v202, %v201
        %v234 = vpack.c.bf16 %v204, %v203
        %v235 = vpack.c.bf16 %v206, %v205
        %v236 = vpack.c.bf16 %v208, %v207
        %v237 = vpack.c.bf16 %v210, %v209
        %v238 = vpack.c.bf16 %v212, %v211
        %v239 = vpack.c.bf16 %v214, %v213
        %v240 = vpack.c.bf16 %v216, %v215
        %vm241 = vcmask 261120
        %v243 = vsel %vm241, %v168, 0
        %245 = vmatprep.subr.bf16.mxu0 0
        %246 = vmatpush1.bf16.msra.mxu0 %v217
        %247 = vmatprep.subr.bf16.mxu0 0
        %248 = vmatpush1.bf16.msra.mxu0 %v218
        %249 = vmatprep.subr.bf16.mxu0 0
        %250 = vmatpush1.bf16.msra.mxu0 0
        %251 = vmatprep.subr.bf16.mxu0 0
        %252 = vmatpush1.bf16.msra.mxu0 0
        %253 = vmatprep.subr.bf16.mxu0 0
        %254 = vmatpush1.bf16.msra.mxu0 0
        %255 = vmatprep.subr.bf16.mxu0 0
        %256 = vmatpush1.bf16.msra.mxu0 0
        %257 = vmatprep.subr.bf16.mxu0 0
        %258 = vmatpush1.bf16.msra.mxu0 0
        %259 = vmatprep.subr.bf16.mxu0 0
        %260 = vmatpush1.bf16.msra.mxu0 0
        %261 = vmatprep.subr.bf16.mxu0 0
        %262 = vmatpush1.bf16.msra.mxu0 0
        %263 = vmatprep.subr.bf16.mxu0 0
        %264 = vmatpush1.bf16.msra.mxu0 0
        %265 = vmatprep.subr.bf16.mxu0 0
        %266 = vmatpush1.bf16.msra.mxu0 0
        %267 = vmatprep.subr.bf16.mxu0 0
        %268 = vmatpush1.bf16.msra.mxu0 0
        %269 = vmatprep.subr.bf16.mxu0 0
        %270 = vmatpush1.bf16.msra.mxu0 0
        %271 = vmatprep.subr.bf16.mxu0 0
        %272 = vmatpush1.bf16.msra.mxu0 0
        %273 = vmatprep.subr.bf16.mxu0 0
        %274 = vmatpush1.bf16.msra.mxu0 0
        %275 = vmatprep.subr.bf16.mxu0 0
        %276 = vmatpush1.bf16.msra.mxu0 0
        %277 = vmatprep.mubr.bf16.mxu0 0
        %278 = vmatmul.mubr.bf16.gmra.mrb[0].mxu0 %v243
        %v279 = vpop.f32.mrb[0].mxu0
        %v280 = vadd.f32 0.0, %v279
        %v281 = vpop.f32.mrb[0].mxu0
        %v282 = vpop.f32.mrb[0].mxu0
        %v283 = vpop.f32.mrb[0].mxu0
        %284 = vdwg.mxu0
        %285 = vmatprep.subr.bf16.mxu0 0
        %286 = vmatpush1.bf16.msra.mxu0 %v219
        %287 = vmatprep.subr.bf16.mxu0 0
        %288 = vmatpush1.bf16.msra.mxu0 %v220
        %289 = vmatprep.subr.bf16.mxu0 0
        %290 = vmatpush1.bf16.msra.mxu0 0
        %291 = vmatprep.subr.bf16.mxu0 0
        %292 = vmatpush1.bf16.msra.mxu0 0
        %293 = vmatprep.subr.bf16.mxu0 0
        %294 = vmatpush1.bf16.msra.mxu0 0
        %295 = vmatprep.subr.bf16.mxu0 0
        %296 = vmatpush1.bf16.msra.mxu0 0
        %297 = vmatprep.subr.bf16.mxu0 0
        %298 = vmatpush1.bf16.msra.mxu0 0
        %299 = vmatprep.subr.bf16.mxu0 0
        %300 = vmatpush1.bf16.msra.mxu0 0
        %301 = vmatprep.subr.bf16.mxu0 0
        %302 = vmatpush1.bf16.msra.mxu0 0
        %303 = vmatprep.subr.bf16.mxu0 0
        %304 = vmatpush1.bf16.msra.mxu0 0
        %305 = vmatprep.subr.bf16.mxu0 0
        %306 = vmatpush1.bf16.msra.mxu0 0
        %307 = vmatprep.subr.bf16.mxu0 0
        %308 = vmatpush1.bf16.msra.mxu0 0
        %309 = vmatprep.subr.bf16.mxu0 0
        %310 = vmatpush1.bf16.msra.mxu0 0
        %311 = vmatprep.subr.bf16.mxu0 0
        %312 = vmatpush1.bf16.msra.mxu0 0
        %313 = vmatprep.subr.bf16.mxu0 0
        %314 = vmatpush1.bf16.msra.mxu0 0
        %315 = vmatprep.subr.bf16.mxu0 0
        %316 = vmatpush1.bf16.msra.mxu0 0
        %317 = vmatprep.mubr.bf16.mxu0 0
        %318 = vmatmul.mubr.bf16.gmra.mrb[0].mxu0 %v243
        %v319 = vpop.f32.mrb[0].mxu0
        %v320 = vadd.f32 0.0, %v319
        %v321 = vpop.f32.mrb[0].mxu0
        %v322 = vpop.f32.mrb[0].mxu0
        %v323 = vpop.f32.mrb[0].mxu0
        %324 = vdwg.mxu0
        %325 = vmatprep.subr.bf16.mxu0 0
        %326 = vmatpush1.bf16.msra.mxu0 %v221
        %327 = vmatprep.subr.bf16.mxu0 0
        %328 = vmatpush1.bf16.msra.mxu0 %v222
        %329 = vmatprep.subr.bf16.mxu0 0
        %330 = vmatpush1.bf16.msra.mxu0 0
        %331 = vmatprep.subr.bf16.mxu0 0
        %332 = vmatpush1.bf16.msra.mxu0 0
        %333 = vmatprep.subr.bf16.mxu0 0
        %334 = vmatpush1.bf16.msra.mxu0 0
        %335 = vmatprep.subr.bf16.mxu0 0
        %336 = vmatpush1.bf16.msra.mxu0 0
        %337 = vmatprep.subr.bf16.mxu0 0
        %338 = vmatpush1.bf16.msra.mxu0 0
        %339 = vmatprep.subr.bf16.mxu0 0
        %340 = vmatpush1.bf16.msra.mxu0 0
        %341 = vmatprep.subr.bf16.mxu0 0
        %342 = vmatpush1.bf16.msra.mxu0 0
        %343 = vmatprep.subr.bf16.mxu0 0
        %344 = vmatpush1.bf16.msra.mxu0 0
        %345 = vmatprep.subr.bf16.mxu0 0
        %346 = vmatpush1.bf16.msra.mxu0 0
        %347 = vmatprep.subr.bf16.mxu0 0
        %348 = vmatpush1.bf16.msra.mxu0 0
        %349 = vmatprep.subr.bf16.mxu0 0
        %350 = vmatpush1.bf16.msra.mxu0 0
        %351 = vmatprep.subr.bf16.mxu0 0
        %352 = vmatpush1.bf16.msra.mxu0 0
        %353 = vmatprep.subr.bf16.mxu0 0
        %354 = vmatpush1.bf16.msra.mxu0 0
        %355 = vmatprep.subr.bf16.mxu0 0
        %356 = vmatpush1.bf16.msra.mxu0 0
        %357 = vmatprep.mubr.bf16.mxu0 0
        %358 = vmatmul.mubr.bf16.gmra.mrb[0].mxu0 %v243
        %v359 = vpop.f32.mrb[0].mxu0
        %v360 = vadd.f32 0.0, %v359
        %v361 = vpop.f32.mrb[0].mxu0
        %v362 = vpop.f32.mrb[0].mxu0
        %v363 = vpop.f32.mrb[0].mxu0
        %364 = vdwg.mxu0
        %365 = vmatprep.subr.bf16.mxu0 0
        %366 = vmatpush1.bf16.msra.mxu0 %v223
        %367 = vmatprep.subr.bf16.mxu0 0
        %368 = vmatpush1.bf16.msra.mxu0 %v224
        %369 = vmatprep.subr.bf16.mxu0 0
        %370 = vmatpush1.bf16.msra.mxu0 0
        %371 = vmatprep.subr.bf16.mxu0 0
        %372 = vmatpush1.bf16.msra.mxu0 0
        %373 = vmatprep.subr.bf16.mxu0 0
        %374 = vmatpush1.bf16.msra.mxu0 0
        %375 = vmatprep.subr.bf16.mxu0 0
        %376 = vmatpush1.bf16.msra.mxu0 0
        %377 = vmatprep.subr.bf16.mxu0 0
        %378 = vmatpush1.bf16.msra.mxu0 0
        %379 = vmatprep.subr.bf16.mxu0 0
        %380 = vmatpush1.bf16.msra.mxu0 0
        %381 = vmatprep.subr.bf16.mxu0 0
        %382 = vmatpush1.bf16.msra.mxu0 0
        %383 = vmatprep.subr.bf16.mxu0 0
        %384 = vmatpush1.bf16.msra.mxu0 0
        %385 = vmatprep.subr.bf16.mxu0 0
        %386 = vmatpush1.bf16.msra.mxu0 0
        %387 = vmatprep.subr.bf16.mxu0 0
        %388 = vmatpush1.bf16.msra.mxu0 0
        %389 = vmatprep.subr.bf16.mxu0 0
        %390 = vmatpush1.bf16.msra.mxu0 0
        %391 = vmatprep.subr.bf16.mxu0 0
        %392 = vmatpush1.bf16.msra.mxu0 0
        %393 = vmatprep.subr.bf16.mxu0 0
        %394 = vmatpush1.bf16.msra.mxu0 0
        %395 = vmatprep.subr.bf16.mxu0 0
        %396 = vmatpush1.bf16.msra.mxu0 0
        %397 = vmatprep.mubr.bf16.mxu0 0
        %398 = vmatmul.mubr.bf16.gmra.mrb[0].mxu0 %v243
        %v399 = vpop.f32.mrb[0].mxu0
        %v400 = vadd.f32 0.0, %v399
        %v401 = vpop.f32.mrb[0].mxu0
        %v402 = vpop.f32.mrb[0].mxu0
        %v403 = vpop.f32.mrb[0].mxu0
        %404 = vdwg.mxu0
        %405 = vmatprep.subr.bf16.mxu0 0
        %406 = vmatpush1.bf16.msra.mxu0 %v225
        %407 = vmatprep.subr.bf16.mxu0 0
        %408 = vmatpush1.bf16.msra.mxu0 %v226
        %409 = vmatprep.subr.bf16.mxu0 0
        %410 = vmatpush1.bf16.msra.mxu0 0
        %411 = vmatprep.subr.bf16.mxu0 0
        %412 = vmatpush1.bf16.msra.mxu0 0
        %413 = vmatprep.subr.bf16.mxu0 0
        %414 = vmatpush1.bf16.msra.mxu0 0
        %415 = vmatprep.subr.bf16.mxu0 0
        %416 = vmatpush1.bf16.msra.mxu0 0
        %417 = vmatprep.subr.bf16.mxu0 0
        %418 = vmatpush1.bf16.msra.mxu0 0
        %419 = vmatprep.subr.bf16.mxu0 0
        %420 = vmatpush1.bf16.msra.mxu0 0
        %421 = vmatprep.subr.bf16.mxu0 0
        %422 = vmatpush1.bf16.msra.mxu0 0
        %423 = vmatprep.subr.bf16.mxu0 0
        %424 = vmatpush1.bf16.msra.mxu0 0
        %425 = vmatprep.subr.bf16.mxu0 0
        %426 = vmatpush1.bf16.msra.mxu0 0
        %427 = vmatprep.subr.bf16.mxu0 0
        %428 = vmatpush1.bf16.msra.mxu0 0
        %429 = vmatprep.subr.bf16.mxu0 0
        %430 = vmatpush1.bf16.msra.mxu0 0
        %431 = vmatprep.subr.bf16.mxu0 0
        %432 = vmatpush1.bf16.msra.mxu0 0
        %433 = vmatprep.subr.bf16.mxu0 0
        %434 = vmatpush1.bf16.msra.mxu0 0
        %435 = vmatprep.subr.bf16.mxu0 0
        %436 = vmatpush1.bf16.msra.mxu0 0
        %437 = vmatprep.mubr.bf16.mxu0 0
        %438 = vmatmul.mubr.bf16.gmra.mrb[0].mxu0 %v243
        %v439 = vpop.f32.mrb[0].mxu0
        %v440 = vadd.f32 0.0, %v439
        %v441 = vpop.f32.mrb[0].mxu0
        %v442 = vpop.f32.mrb[0].mxu0
        %v443 = vpop.f32.mrb[0].mxu0
        %444 = vdwg.mxu0
        %445 = vmatprep.subr.bf16.mxu0 0
        %446 = vmatpush1.bf16.msra.mxu0 %v227
        %447 = vmatprep.subr.bf16.mxu0 0
        %448 = vmatpush1.bf16.msra.mxu0 %v228
        %449 = vmatprep.subr.bf16.mxu0 0
        %450 = vmatpush1.bf16.msra.mxu0 0
        %451 = vmatprep.subr.bf16.mxu0 0
        %452 = vmatpush1.bf16.msra.mxu0 0
        %453 = vmatprep.subr.bf16.mxu0 0
        %454 = vmatpush1.bf16.msra.mxu0 0
        %455 = vmatprep.subr.bf16.mxu0 0
        %456 = vmatpush1.bf16.msra.mxu0 0
        %457 = vmatprep.subr.bf16.mxu0 0
        %458 = vmatpush1.bf16.msra.mxu0 0
        %459 = vmatprep.subr.bf16.mxu0 0
        %460 = vmatpush1.bf16.msra.mxu0 0
        %461 = vmatprep.subr.bf16.mxu0 0
        %462 = vmatpush1.bf16.msra.mxu0 0
        %463 = vmatprep.subr.bf16.mxu0 0
        %464 = vmatpush1.bf16.msra.mxu0 0
        %465 = vmatprep.subr.bf16.mxu0 0
        %466 = vmatpush1.bf16.msra.mxu0 0
        %467 = vmatprep.subr.bf16.mxu0 0
        %468 = vmatpush1.bf16.msra.mxu0 0
        %469 = vmatprep.subr.bf16.mxu0 0
        %470 = vmatpush1.bf16.msra.mxu0 0
        %471 = vmatprep.subr.bf16.mxu0 0
        %472 = vmatpush1.bf16.msra.mxu0 0
        %473 = vmatprep.subr.bf16.mxu0 0
        %474 = vmatpush1.bf16.msra.mxu0 0
        %475 = vmatprep.subr.bf16.mxu0 0
        %476 = vmatpush1.bf16.msra.mxu0 0
        %477 = vmatprep.mubr.bf16.mxu0 0
        %478 = vmatmul.mubr.bf16.gmra.mrb[0].mxu0 %v243
        %v479 = vpop.f32.mrb[0].mxu0
        %v480 = vadd.f32 0.0, %v479
        %v481 = vpop.f32.mrb[0].mxu0
        %v482 = vpop.f32.mrb[0].mxu0
        %v483 = vpop.f32.mrb[0].mxu0
        %484 = vdwg.mxu0
        %485 = vmatprep.subr.bf16.mxu0 0
        %486 = vmatpush1.bf16.msra.mxu0 %v229
        %487 = vmatprep.subr.bf16.mxu0 0
        %488 = vmatpush1.bf16.msra.mxu0 %v230
        %489 = vmatprep.subr.bf16.mxu0 0
        %490 = vmatpush1.bf16.msra.mxu0 0
        %491 = vmatprep.subr.bf16.mxu0 0
        %492 = vmatpush1.bf16.msra.mxu0 0
        %493 = vmatprep.subr.bf16.mxu0 0
        %494 = vmatpush1.bf16.msra.mxu0 0
        %495 = vmatprep.subr.bf16.mxu0 0
        %496 = vmatpush1.bf16.msra.mxu0 0
        %497 = vmatprep.subr.bf16.mxu0 0
        %498 = vmatpush1.bf16.msra.mxu0 0
        %499 = vmatprep.subr.bf16.mxu0 0
        %500 = vmatpush1.bf16.msra.mxu0 0
        %501 = vmatprep.subr.bf16.mxu0 0
        %502 = vmatpush1.bf16.msra.mxu0 0
        %503 = vmatprep.subr.bf16.mxu0 0
        %504 = vmatpush1.bf16.msra.mxu0 0
        %505 = vmatprep.subr.bf16.mxu0 0
        %506 = vmatpush1.bf16.msra.mxu0 0
        %507 = vmatprep.subr.bf16.mxu0 0
        %508 = vmatpush1.bf16.msra.mxu0 0
        %509 = vmatprep.subr.bf16.mxu0 0
        %510 = vmatpush1.bf16.msra.mxu0 0
        %511 = vmatprep.subr.bf16.mxu0 0
        %512 = vmatpush1.bf16.msra.mxu0 0
        %513 = vmatprep.subr.bf16.mxu0 0
        %514 = vmatpush1.bf16.msra.mxu0 0
        %515 = vmatprep.subr.bf16.mxu0 0
        %516 = vmatpush1.bf16.msra.mxu0 0
        %517 = vmatprep.mubr.bf16.mxu0 0
        %518 = vmatmul.mubr.bf16.gmra.mrb[0].mxu0 %v243
        %v519 = vpop.f32.mrb[0].mxu0
        %v520 = vadd.f32 0.0, %v519
        %v521 = vpop.f32.mrb[0].mxu0
        %v522 = vpop.f32.mrb[0].mxu0
        %v523 = vpop.f32.mrb[0].mxu0
        %524 = vdwg.mxu0
        %525 = vmatprep.subr.bf16.mxu0 0
        %526 = vmatpush1.bf16.msra.mxu0 %v231
        %527 = vmatprep.subr.bf16.mxu0 0
        %528 = vmatpush1.bf16.msra.mxu0 %v232
        %529 = vmatprep.subr.bf16.mxu0 0
        %530 = vmatpush1.bf16.msra.mxu0 0
        %531 = vmatprep.subr.bf16.mxu0 0
        %532 = vmatpush1.bf16.msra.mxu0 0
        %533 = vmatprep.subr.bf16.mxu0 0
        %534 = vmatpush1.bf16.msra.mxu0 0
        %535 = vmatprep.subr.bf16.mxu0 0
        %536 = vmatpush1.bf16.msra.mxu0 0
        %537 = vmatprep.subr.bf16.mxu0 0
        %538 = vmatpush1.bf16.msra.mxu0 0
        %539 = vmatprep.subr.bf16.mxu0 0
        %540 = vmatpush1.bf16.msra.mxu0 0
        %541 = vmatprep.subr.bf16.mxu0 0
        %542 = vmatpush1.bf16.msra.mxu0 0
        %543 = vmatprep.subr.bf16.mxu0 0
        %544 = vmatpush1.bf16.msra.mxu0 0
        %545 = vmatprep.subr.bf16.mxu0 0
        %546 = vmatpush1.bf16.msra.mxu0 0
        %547 = vmatprep.subr.bf16.mxu0 0
        %548 = vmatpush1.bf16.msra.mxu0 0
        %549 = vmatprep.subr.bf16.mxu0 0
        %550 = vmatpush1.bf16.msra.mxu0 0
        %551 = vmatprep.subr.bf16.mxu0 0
        %552 = vmatpush1.bf16.msra.mxu0 0
        %553 = vmatprep.subr.bf16.mxu0 0
        %554 = vmatpush1.bf16.msra.mxu0 0
        %555 = vmatprep.subr.bf16.mxu0 0
        %556 = vmatpush1.bf16.msra.mxu0 0
        %557 = vmatprep.mubr.bf16.mxu0 0
        %558 = vmatmul.mubr.bf16.gmra.mrb[0].mxu0 %v243
        %v559 = vpop.f32.mrb[0].mxu0
        %v560 = vadd.f32 0.0, %v559
        %v561 = vpop.f32.mrb[0].mxu0
        %v562 = vpop.f32.mrb[0].mxu0
        %v563 = vpop.f32.mrb[0].mxu0
        %564 = vdwg.mxu0
        %565 = vmatprep.subr.bf16.mxu0 0
        %566 = vmatpush1.bf16.msra.mxu0 %v233
        %567 = vmatprep.subr.bf16.mxu0 0
        %568 = vmatpush1.bf16.msra.mxu0 %v234
        %569 = vmatprep.subr.bf16.mxu0 0
        %570 = vmatpush1.bf16.msra.mxu0 0
        %571 = vmatprep.subr.bf16.mxu0 0
        %572 = vmatpush1.bf16.msra.mxu0 0
        %573 = vmatprep.subr.bf16.mxu0 0
        %574 = vmatpush1.bf16.msra.mxu0 0
        %575 = vmatprep.subr.bf16.mxu0 0
        %576 = vmatpush1.bf16.msra.mxu0 0
        %577 = vmatprep.subr.bf16.mxu0 0
        %578 = vmatpush1.bf16.msra.mxu0 0
        %579 = vmatprep.subr.bf16.mxu0 0
        %580 = vmatpush1.bf16.msra.mxu0 0
        %581 = vmatprep.subr.bf16.mxu0 0
        %582 = vmatpush1.bf16.msra.mxu0 0
        %583 = vmatprep.subr.bf16.mxu0 0
        %584 = vmatpush1.bf16.msra.mxu0 0
        %585 = vmatprep.subr.bf16.mxu0 0
        %586 = vmatpush1.bf16.msra.mxu0 0
        %587 = vmatprep.subr.bf16.mxu0 0
        %588 = vmatpush1.bf16.msra.mxu0 0
        %589 = vmatprep.subr.bf16.mxu0 0
        %590 = vmatpush1.bf16.msra.mxu0 0
        %591 = vmatprep.subr.bf16.mxu0 0
        %592 = vmatpush1.bf16.msra.mxu0 0
        %593 = vmatprep.subr.bf16.mxu0 0
        %594 = vmatpush1.bf16.msra.mxu0 0
        %595 = vmatprep.subr.bf16.mxu0 0
        %596 = vmatpush1.bf16.msra.mxu0 0
        %597 = vmatprep.mubr.bf16.mxu0 0
        %598 = vmatmul.mubr.bf16.gmra.mrb[0].mxu0 %v243
        %v599 = vpop.f32.mrb[0].mxu0
        %v600 = vadd.f32 0.0, %v599
        %v601 = vpop.f32.mrb[0].mxu0
        %v602 = vpop.f32.mrb[0].mxu0
        %v603 = vpop.f32.mrb[0].mxu0
        %604 = vdwg.mxu0
        %605 = vmatprep.subr.bf16.mxu0 0
        %606 = vmatpush1.bf16.msra.mxu0 %v235
        %607 = vmatprep.subr.bf16.mxu0 0
        %608 = vmatpush1.bf16.msra.mxu0 %v236
        %609 = vmatprep.subr.bf16.mxu0 0
        %610 = vmatpush1.bf16.msra.mxu0 0
        %611 = vmatprep.subr.bf16.mxu0 0
        %612 = vmatpush1.bf16.msra.mxu0 0
        %613 = vmatprep.subr.bf16.mxu0 0
        %614 = vmatpush1.bf16.msra.mxu0 0
        %615 = vmatprep.subr.bf16.mxu0 0
        %616 = vmatpush1.bf16.msra.mxu0 0
        %617 = vmatprep.subr.bf16.mxu0 0
        %618 = vmatpush1.bf16.msra.mxu0 0
        %619 = vmatprep.subr.bf16.mxu0 0
        %620 = vmatpush1.bf16.msra.mxu0 0
        %621 = vmatprep.subr.bf16.mxu0 0
        %622 = vmatpush1.bf16.msra.mxu0 0
        %623 = vmatprep.subr.bf16.mxu0 0
        %624 = vmatpush1.bf16.msra.mxu0 0
        %625 = vmatprep.subr.bf16.mxu0 0
        %626 = vmatpush1.bf16.msra.mxu0 0
        %627 = vmatprep.subr.bf16.mxu0 0
        %628 = vmatpush1.bf16.msra.mxu0 0
        %629 = vmatprep.subr.bf16.mxu0 0
        %630 = vmatpush1.bf16.msra.mxu0 0
        %631 = vmatprep.subr.bf16.mxu0 0
        %632 = vmatpush1.bf16.msra.mxu0 0
        %633 = vmatprep.subr.bf16.mxu0 0
        %634 = vmatpush1.bf16.msra.mxu0 0
        %635 = vmatprep.subr.bf16.mxu0 0
        %636 = vmatpush1.bf16.msra.mxu0 0
        %637 = vmatprep.mubr.bf16.mxu0 0
        %638 = vmatmul.mubr.bf16.gmra.mrb[0].mxu0 %v243
        %v639 = vpop.f32.mrb[0].mxu0
        %v640 = vadd.f32 0.0, %v639
        %v641 = vpop.f32.mrb[0].mxu0
        %v642 = vpop.f32.mrb[0].mxu0
        %v643 = vpop.f32.mrb[0].mxu0
        %644 = vdwg.mxu0
        %645 = vmatprep.subr.bf16.mxu0 0
        %646 = vmatpush1.bf16.msra.mxu0 %v237
        %647 = vmatprep.subr.bf16.mxu0 0
        %648 = vmatpush1.bf16.msra.mxu0 %v238
        %649 = vmatprep.subr.bf16.mxu0 0
        %650 = vmatpush1.bf16.msra.mxu0 0
        %651 = vmatprep.subr.bf16.mxu0 0
        %652 = vmatpush1.bf16.msra.mxu0 0
        %653 = vmatprep.subr.bf16.mxu0 0
        %654 = vmatpush1.bf16.msra.mxu0 0
        %655 = vmatprep.subr.bf16.mxu0 0
        %656 = vmatpush1.bf16.msra.mxu0 0
        %657 = vmatprep.subr.bf16.mxu0 0
        %658 = vmatpush1.bf16.msra.mxu0 0
        %659 = vmatprep.subr.bf16.mxu0 0
        %660 = vmatpush1.bf16.msra.mxu0 0
        %661 = vmatprep.subr.bf16.mxu0 0
        %662 = vmatpush1.bf16.msra.mxu0 0
        %663 = vmatprep.subr.bf16.mxu0 0
        %664 = vmatpush1.bf16.msra.mxu0 0
        %665 = vmatprep.subr.bf16.mxu0 0
        %666 = vmatpush1.bf16.msra.mxu0 0
        %667 = vmatprep.subr.bf16.mxu0 0
        %668 = vmatpush1.bf16.msra.mxu0 0
        %669 = vmatprep.subr.bf16.mxu0 0
        %670 = vmatpush1.bf16.msra.mxu0 0
        %671 = vmatprep.subr.bf16.mxu0 0
        %672 = vmatpush1.bf16.msra.mxu0 0
        %673 = vmatprep.subr.bf16.mxu0 0
        %674 = vmatpush1.bf16.msra.mxu0 0
        %675 = vmatprep.subr.bf16.mxu0 0
        %676 = vmatpush1.bf16.msra.mxu0 0
        %677 = vmatprep.mubr.bf16.mxu0 0
        %678 = vmatmul.mubr.bf16.gmra.mrb[0].mxu0 %v243
        %v679 = vpop.f32.mrb[0].mxu0
        %v680 = vadd.f32 0.0, %v679
        %v681 = vpop.f32.mrb[0].mxu0
        %v682 = vpop.f32.mrb[0].mxu0
        %v683 = vpop.f32.mrb[0].mxu0
        %684 = vdwg.mxu0
        %685 = vmatprep.subr.bf16.mxu0 0
        %686 = vmatpush1.bf16.msra.mxu0 %v239
        %687 = vmatprep.subr.bf16.mxu0 0
        %688 = vmatpush1.bf16.msra.mxu0 %v240
        %689 = vmatprep.subr.bf16.mxu0 0
        %690 = vmatpush1.bf16.msra.mxu0 0
        %691 = vmatprep.subr.bf16.mxu0 0
        %692 = vmatpush1.bf16.msra.mxu0 0
        %693 = vmatprep.subr.bf16.mxu0 0
        %694 = vmatpush1.bf16.msra.mxu0 0
        %695 = vmatprep.subr.bf16.mxu0 0
        %696 = vmatpush1.bf16.msra.mxu0 0
        %697 = vmatprep.subr.bf16.mxu0 0
        %698 = vmatpush1.bf16.msra.mxu0 0
        %699 = vmatprep.subr.bf16.mxu0 0
        %700 = vmatpush1.bf16.msra.mxu0 0
        %701 = vmatprep.subr.bf16.mxu0 0
        %702 = vmatpush1.bf16.msra.mxu0 0
        %703 = vmatprep.subr.bf16.mxu0 0
        %704 = vmatpush1.bf16.msra.mxu0 0
        %705 = vmatprep.subr.bf16.mxu0 0
        %706 = vmatpush1.bf16.msra.mxu0 0
        %707 = vmatprep.subr.bf16.mxu0 0
        %708 = vmatpush1.bf16.msra.mxu0 0
        %709 = vmatprep.subr.bf16.mxu0 0
        %710 = vmatpush1.bf16.msra.mxu0 0
        %711 = vmatprep.subr.bf16.mxu0 0
        %712 = vmatpush1.bf16.msra.mxu0 0
        %713 = vmatprep.subr.bf16.mxu0 0
        %714 = vmatpush1.bf16.msra.mxu0 0
        %715 = vmatprep.subr.bf16.mxu0 0
        %716 = vmatpush1.bf16.msra.mxu0 0
        %717 = vmatprep.mubr.bf16.mxu0 0
        %718 = vmatmul.mubr.bf16.gmra.mrb[0].mxu0 %v243
        %v719 = vpop.f32.mrb[0].mxu0
        %v720 = vadd.f32 0.0, %v719
        %v721 = vpop.f32.mrb[0].mxu0
        %v722 = vpop.f32.mrb[0].mxu0
        %v723 = vpop.f32.mrb[0].mxu0
        %724 = vdwg.mxu0
        %v725 = vmul.f32 %v280, 0.35355338
        %v726 = vmul.f32 %v320, 0.35355338
        %v727 = vmul.f32 %v360, 0.35355338
        %v728 = vmul.f32 %v400, 0.35355338
        %v729 = vpack.c.bf16 %v725, %v725
        %v730 = vpack.c.bf16 %v726, %v726
        %v731 = vpack.c.bf16 %v727, %v727
        %v732 = vpack.c.bf16 %v728, %v728
        %v733 = vpack.c.bf16 %v440, %v440
        %v734 = vpack.c.bf16 %v480, %v480
        %v735 = vpack.c.bf16 %v520, %v520
        %v736 = vpack.c.bf16 %v560, %v560
        %v737 = vpack.c.bf16 %v600, %v600
        %v738 = vpack.c.bf16 %v640, %v640
        %v739 = vpack.c.bf16 %v680, %v680
        %v740 = vpack.c.bf16 %v720, %v720
        %vm741 = vcmask 64512
        %v743 = vsel %vm741, %v729, 0
        %v746 = vsel %vm741, %v733, 0
        %748 = vmatprep.subr.bf16.mxu0 0
        %749 = vmatpush1.bf16.xpose.msra.mxu0 %v746
        %750 = vmatprep.subr.bf16.mxu0 0
        %751 = vmatpush1.bf16.xpose.msra.mxu0 0
        %752 = vmatprep.subr.bf16.mxu0 0
        %753 = vmatpush1.bf16.xpose.msra.mxu0 0
        %754 = vmatprep.subr.bf16.mxu0 0
        %755 = vmatpush1.bf16.xpose.msra.mxu0 0
        %756 = vmatprep.subr.bf16.mxu0 0
        %757 = vmatpush1.bf16.xpose.msra.mxu0 0
        %758 = vmatprep.subr.bf16.mxu0 0
        %759 = vmatpush1.bf16.xpose.msra.mxu0 0
        %760 = vmatprep.subr.bf16.mxu0 0
        %761 = vmatpush1.bf16.xpose.msra.mxu0 0
        %762 = vmatprep.subr.bf16.mxu0 0
        %763 = vmatpush1.bf16.xpose.msra.mxu0 0
        %764 = vmatprep.subr.bf16.mxu0 0
        %765 = vmatpush1.bf16.xpose.msra.mxu0 0
        %766 = vmatprep.subr.bf16.mxu0 0
        %767 = vmatpush1.bf16.xpose.msra.mxu0 0
        %768 = vmatprep.subr.bf16.mxu0 0
        %769 = vmatpush1.bf16.xpose.msra.mxu0 0
        %770 = vmatprep.subr.bf16.mxu0 0
        %771 = vmatpush1.bf16.xpose.msra.mxu0 0
        %772 = vmatprep.subr.bf16.mxu0 0
        %773 = vmatpush1.bf16.xpose.msra.mxu0 0
        %774 = vmatprep.subr.bf16.mxu0 0
        %775 = vmatpush1.bf16.xpose.msra.mxu0 0
        %776 = vmatprep.subr.bf16.mxu0 0
        %777 = vmatpush1.bf16.xpose.msra.mxu0 0
        %778 = vmatprep.subr.bf16.mxu0 0
        %779 = vmatpush1.bf16.xpose.msra.mxu0 0
        %780 = vmatprep.mubr.bf16.mxu0 0
        %781 = vmatmul.mubr.bf16.gmra.mrb[0].mxu0 %v743
        %v782 = vpop.f32.mrb[0].mxu0
        %v783 = vadd.f32 0.0, %v782
        %v784 = vpop.f32.mrb[0].mxu0
        %v785 = vpop.f32.mrb[0].mxu0
        %v786 = vpop.f32.mrb[0].mxu0
        %787 = vdwg.mxu0
        %v789 = vsel %vm741, %v730, 0
        %v792 = vsel %vm741, %v734, 0
        %794 = vmatprep.subr.bf16.mxu0 0
        %795 = vmatpush1.bf16.xpose.msra.mxu0 %v792
        %796 = vmatprep.subr.bf16.mxu0 0
        %797 = vmatpush1.bf16.xpose.msra.mxu0 0
        %798 = vmatprep.subr.bf16.mxu0 0
        %799 = vmatpush1.bf16.xpose.msra.mxu0 0
        %800 = vmatprep.subr.bf16.mxu0 0
        %801 = vmatpush1.bf16.xpose.msra.mxu0 0
        %802 = vmatprep.subr.bf16.mxu0 0
        %803 = vmatpush1.bf16.xpose.msra.mxu0 0
        %804 = vmatprep.subr.bf16.mxu0 0
        %805 = vmatpush1.bf16.xpose.msra.mxu0 0
        %806 = vmatprep.subr.bf16.mxu0 0
        %807 = vmatpush1.bf16.xpose.msra.mxu0 0
        %808 = vmatprep.subr.bf16.mxu0 0
        %809 = vmatpush1.bf16.xpose.msra.mxu0 0
        %810 = vmatprep.subr.bf16.mxu0 0
        %811 = vmatpush1.bf16.xpose.msra.mxu0 0
        %812 = vmatprep.subr.bf16.mxu0 0
        %813 = vmatpush1.bf16.xpose.msra.mxu0 0
        %814 = vmatprep.subr.bf16.mxu0 0
        %815 = vmatpush1.bf16.xpose.msra.mxu0 0
        %816 = vmatprep.subr.bf16.mxu0 0
        %817 = vmatpush1.bf16.xpose.msra.mxu0 0
        %818 = vmatprep.subr.bf16.mxu0 0
        %819 = vmatpush1.bf16.xpose.msra.mxu0 0
        %820 = vmatprep.subr.bf16.mxu0 0
        %821 = vmatpush1.bf16.xpose.msra.mxu0 0
        %822 = vmatprep.subr.bf16.mxu0 0
        %823 = vmatpush1.bf16.xpose.msra.mxu0 0
        %824 = vmatprep.subr.bf16.mxu0 0
        %825 = vmatpush1.bf16.xpose.msra.mxu0 0
        %826 = vmatprep.mubr.bf16.mxu0 0
        %827 = vmatmul.mubr.bf16.gmra.mrb[0].mxu0 %v789
        %v828 = vpop.f32.mrb[0].mxu0
        %v829 = vadd.f32 0.0, %v828
        %v830 = vpop.f32.mrb[0].mxu0
        %v831 = vpop.f32.mrb[0].mxu0
        %v832 = vpop.f32.mrb[0].mxu0
        %833 = vdwg.mxu0
        %v835 = vsel %vm741, %v731, 0
        %v838 = vsel %vm741, %v735, 0
        %840 = vmatprep.subr.bf16.mxu0 0
        %841 = vmatpush1.bf16.xpose.msra.mxu0 %v838
        %842 = vmatprep.subr.bf16.mxu0 0
        %843 = vmatpush1.bf16.xpose.msra.mxu0 0
        %844 = vmatprep.subr.bf16.mxu0 0
        %845 = vmatpush1.bf16.xpose.msra.mxu0 0
        %846 = vmatprep.subr.bf16.mxu0 0
        %847 = vmatpush1.bf16.xpose.msra.mxu0 0
        %848 = vmatprep.subr.bf16.mxu0 0
        %849 = vmatpush1.bf16.xpose.msra.mxu0 0
        %850 = vmatprep.subr.bf16.mxu0 0
        %851 = vmatpush1.bf16.xpose.msra.mxu0 0
        %852 = vmatprep.subr.bf16.mxu0 0
        %853 = vmatpush1.bf16.xpose.msra.mxu0 0
        %854 = vmatprep.subr.bf16.mxu0 0
        %855 = vmatpush1.bf16.xpose.msra.mxu0 0
        %856 = vmatprep.subr.bf16.mxu0 0
        %857 = vmatpush1.bf16.xpose.msra.mxu0 0
        %858 = vmatprep.subr.bf16.mxu0 0
        %859 = vmatpush1.bf16.xpose.msra.mxu0 0
        %860 = vmatprep.subr.bf16.mxu0 0
        %861 = vmatpush1.bf16.xpose.msra.mxu0 0
        %862 = vmatprep.subr.bf16.mxu0 0
        %863 = vmatpush1.bf16.xpose.msra.mxu0 0
        %864 = vmatprep.subr.bf16.mxu0 0
        %865 = vmatpush1.bf16.xpose.msra.mxu0 0
        %866 = vmatprep.subr.bf16.mxu0 0
        %867 = vmatpush1.bf16.xpose.msra.mxu0 0
        %868 = vmatprep.subr.bf16.mxu0 0
        %869 = vmatpush1.bf16.xpose.msra.mxu0 0
        %870 = vmatprep.subr.bf16.mxu0 0
        %871 = vmatpush1.bf16.xpose.msra.mxu0 0
        %872 = vmatprep.mubr.bf16.mxu0 0
        %873 = vmatmul.mubr.bf16.gmra.mrb[0].mxu0 %v835
        %v874 = vpop.f32.mrb[0].mxu0
        %v875 = vadd.f32 0.0, %v874
        %v876 = vpop.f32.mrb[0].mxu0
        %v877 = vpop.f32.mrb[0].mxu0
        %v878 = vpop.f32.mrb[0].mxu0
        %879 = vdwg.mxu0
        %v881 = vsel %vm741, %v732, 0
        %v884 = vsel %vm741, %v736, 0
        %886 = vmatprep.subr.bf16.mxu0 0
        %887 = vmatpush1.bf16.xpose.msra.mxu0 %v884
        %888 = vmatprep.subr.bf16.mxu0 0
        %889 = vmatpush1.bf16.xpose.msra.mxu0 0
        %890 = vmatprep.subr.bf16.mxu0 0
        %891 = vmatpush1.bf16.xpose.msra.mxu0 0
        %892 = vmatprep.subr.bf16.mxu0 0
        %893 = vmatpush1.bf16.xpose.msra.mxu0 0
        %894 = vmatprep.subr.bf16.mxu0 0
        %895 = vmatpush1.bf16.xpose.msra.mxu0 0
        %896 = vmatprep.subr.bf16.mxu0 0
        %897 = vmatpush1.bf16.xpose.msra.mxu0 0
        %898 = vmatprep.subr.bf16.mxu0 0
        %899 = vmatpush1.bf16.xpose.msra.mxu0 0
        %900 = vmatprep.subr.bf16.mxu0 0
        %901 = vmatpush1.bf16.xpose.msra.mxu0 0
        %902 = vmatprep.subr.bf16.mxu0 0
        %903 = vmatpush1.bf16.xpose.msra.mxu0 0
        %904 = vmatprep.subr.bf16.mxu0 0
        %905 = vmatpush1.bf16.xpose.msra.mxu0 0
        %906 = vmatprep.subr.bf16.mxu0 0
        %907 = vmatpush1.bf16.xpose.msra.mxu0 0
        %908 = vmatprep.subr.bf16.mxu0 0
        %909 = vmatpush1.bf16.xpose.msra.mxu0 0
        %910 = vmatprep.subr.bf16.mxu0 0
        %911 = vmatpush1.bf16.xpose.msra.mxu0 0
        %912 = vmatprep.subr.bf16.mxu0 0
        %913 = vmatpush1.bf16.xpose.msra.mxu0 0
        %914 = vmatprep.subr.bf16.mxu0 0
        %915 = vmatpush1.bf16.xpose.msra.mxu0 0
        %916 = vmatprep.subr.bf16.mxu0 0
        %917 = vmatpush1.bf16.xpose.msra.mxu0 0
        %918 = vmatprep.mubr.bf16.mxu0 0
        %919 = vmatmul.mubr.bf16.gmra.mrb[0].mxu0 %v881
        %v920 = vpop.f32.mrb[0].mxu0
        %v921 = vadd.f32 0.0, %v920
        %v922 = vpop.f32.mrb[0].mxu0
        %v923 = vpop.f32.mrb[0].mxu0
        %v924 = vpop.f32.mrb[0].mxu0
        %925 = vdwg.mxu0
        %v926 = vsel %vm741, %v783, -inf
        %927 = vmax.xlane.f32.xlu0 %v926
        %v928 = vpop.xlane.xlu0 %927
        %v929 = vsel %vm741, %v829, -inf
        %930 = vmax.xlane.f32.xlu0 %v929
        %v931 = vpop.xlane.xlu0 %930
        %v932 = vsel %vm741, %v875, -inf
        %933 = vmax.xlane.f32.xlu0 %v932
        %v934 = vpop.xlane.xlu0 %933
        %v935 = vsel %vm741, %v921, -inf
        %936 = vmax.xlane.f32.xlu0 %v935
        %v937 = vpop.xlane.xlu0 %936
        %v938 = vsub.f32 %v783, %v928
        %v939 = vsub.f32 %v829, %v931
        %v940 = vsub.f32 %v875, %v934
        %v941 = vsub.f32 %v921, %v937
        %v942 = vmul.f32 %v938, 1.442695
        %v943 = vpow.pop %v942
        %v944 = vmul.f32 %v939, 1.442695
        %v945 = vpow.pop %v944
        %v946 = vmul.f32 %v940, 1.442695
        %v947 = vpow.pop %v946
        %v948 = vmul.f32 %v941, 1.442695
        %v949 = vpow.pop %v948
        %v950 = vsel %vm741, %v943, 0.0
        %951 = vadd.xlane.f32.xlu0 %v950
        %v952 = vpop.xlane.xlu0 %951
        %v953 = vsel %vm741, %v945, 0.0
        %954 = vadd.xlane.f32.xlu0 %v953
        %v955 = vpop.xlane.xlu0 %954
        %v956 = vsel %vm741, %v947, 0.0
        %957 = vadd.xlane.f32.xlu0 %v956
        %v958 = vpop.xlane.xlu0 %957
        %v959 = vsel %vm741, %v949, 0.0
        %960 = vadd.xlane.f32.xlu0 %v959
        %v961 = vpop.xlane.xlu0 %960
        %v962 = vrcp.pop %v952
        %v963 = vrcp.pop %v955
        %v964 = vrcp.pop %v958
        %v965 = vrcp.pop %v961
        %v966 = vmul.f32 %v943, %v962
        %v967 = vmul.f32 %v945, %v963
        %v968 = vmul.f32 %v947, %v964
        %v969 = vmul.f32 %v949, %v965
        %v970 = vpack.c.bf16 %v966, %v966
        %v971 = vpack.c.bf16 %v967, %v967
        %v972 = vpack.c.bf16 %v968, %v968
        %v973 = vpack.c.bf16 %v969, %v969
        %v975 = vsel %vm741, %v970, 0
        %vm977 = vcmask 1043456
        %v979 = vsel %vm977, %v737, 0
        %981 = vmatprep.subr.bf16.mxu0 0
        %982 = vmatpush1.bf16.msra.mxu0 %v979
        %983 = vmatprep.subr.bf16.mxu0 0
        %984 = vmatpush1.bf16.msra.mxu0 0
        %985 = vmatprep.subr.bf16.mxu0 0
        %986 = vmatpush1.bf16.msra.mxu0 0
        %987 = vmatprep.subr.bf16.mxu0 0
        %988 = vmatpush1.bf16.msra.mxu0 0
        %989 = vmatprep.subr.bf16.mxu0 0
        %990 = vmatpush1.bf16.msra.mxu0 0
        %991 = vmatprep.subr.bf16.mxu0 0
        %992 = vmatpush1.bf16.msra.mxu0 0
        %993 = vmatprep.subr.bf16.mxu0 0
        %994 = vmatpush1.bf16.msra.mxu0 0
        %995 = vmatprep.subr.bf16.mxu0 0
        %996 = vmatpush1.bf16.msra.mxu0 0
        %997 = vmatprep.subr.bf16.mxu0 0
        %998 = vmatpush1.bf16.msra.mxu0 0
        %999 = vmatprep.subr.bf16.mxu0 0
        %1000 = vmatpush1.bf16.msra.mxu0 0
        %1001 = vmatprep.subr.bf16.mxu0 0
        %1002 = vmatpush1.bf16.msra.mxu0 0
        %1003 = vmatprep.subr.bf16.mxu0 0
        %1004 = vmatpush1.bf16.msra.mxu0 0
        %1005 = vmatprep.subr.bf16.mxu0 0
        %1006 = vmatpush1.bf16.msra.mxu0 0
        %1007 = vmatprep.subr.bf16.mxu0 0
        %1008 = vmatpush1.bf16.msra.mxu0 0
        %1009 = vmatprep.subr.bf16.mxu0 0
        %1010 = vmatpush1.bf16.msra.mxu0 0
        %1011 = vmatprep.subr.bf16.mxu0 0
        %1012 = vmatpush1.bf16.msra.mxu0 0
        %1013 = vmatprep.mubr.bf16.mxu0 0
        %1014 = vmatmul.mubr.bf16.gmra.mrb[0].mxu0 %v975
        %v1015 = vpop.f32.mrb[0].mxu0
        %v1016 = vadd.f32 0.0, %v1015
        %v1017 = vpop.f32.mrb[0].mxu0
        %v1018 = vpop.f32.mrb[0].mxu0
        %v1019 = vpop.f32.mrb[0].mxu0
        %1020 = vdwg.mxu0
        %v1022 = vsel %vm741, %v971, 0
        %v1025 = vsel %vm977, %v738, 0
        %1027 = vmatprep.subr.bf16.mxu0 0
        %1028 = vmatpush1.bf16.msra.mxu0 %v1025
        %1029 = vmatprep.subr.bf16.mxu0 0
        %1030 = vmatpush1.bf16.msra.mxu0 0
        %1031 = vmatprep.subr.bf16.mxu0 0
        %1032 = vmatpush1.bf16.msra.mxu0 0
        %1033 = vmatprep.subr.bf16.mxu0 0
        %1034 = vmatpush1.bf16.msra.mxu0 0
        %1035 = vmatprep.subr.bf16.mxu0 0
        %1036 = vmatpush1.bf16.msra.mxu0 0
        %1037 = vmatprep.subr.bf16.mxu0 0
        %1038 = vmatpush1.bf16.msra.mxu0 0
        %1039 = vmatprep.subr.bf16.mxu0 0
        %1040 = vmatpush1.bf16.msra.mxu0 0
        %1041 = vmatprep.subr.bf16.mxu0 0
        %1042 = vmatpush1.bf16.msra.mxu0 0
        %1043 = vmatprep.subr.bf16.mxu0 0
        %1044 = vmatpush1.bf16.msra.mxu0 0
        %1045 = vmatprep.subr.bf16.mxu0 0
        %1046 = vmatpush1.bf16.msra.mxu0 0
        %1047 = vmatprep.subr.bf16.mxu0 0
        %1048 = vmatpush1.bf16.msra.mxu0 0
        %1049 = vmatprep.subr.bf16.mxu0 0
        %1050 = vmatpush1.bf16.msra.mxu0 0
        %1051 = vmatprep.subr.bf16.mxu0 0
        %1052 = vmatpush1.bf16.msra.mxu0 0
        %1053 = vmatprep.subr.bf16.mxu0 0
        %1054 = vmatpush1.bf16.msra.mxu0 0
        %1055 = vmatprep.subr.bf16.mxu0 0
        %1056 = vmatpush1.bf16.msra.mxu0 0
        %1057 = vmatprep.subr.bf16.mxu0 0
        %1058 = vmatpush1.bf16.msra.mxu0 0
        %1059 = vmatprep.mubr.bf16.mxu0 0
        %1060 = vmatmul.mubr.bf16.gmra.mrb[0].mxu0 %v1022
        %v1061 = vpop.f32.mrb[0].mxu0
        %v1062 = vadd.f32 0.0, %v1061
        %v1063 = vpop.f32.mrb[0].mxu0
        %v1064 = vpop.f32.mrb[0].mxu0
        %v1065 = vpop.f32.mrb[0].mxu0
        %1066 = vdwg.mxu0
        %v1068 = vsel %vm741, %v972, 0
        %v1071 = vsel %vm977, %v739, 0
        %1073 = vmatprep.subr.bf16.mxu0 0
        %1074 = vmatpush1.bf16.msra.mxu0 %v1071
        %1075 = vmatprep.subr.bf16.mxu0 0
        %1076 = vmatpush1.bf16.msra.mxu0 0
        %1077 = vmatprep.subr.bf16.mxu0 0
        %1078 = vmatpush1.bf16.msra.mxu0 0
        %1079 = vmatprep.subr.bf16.mxu0 0
        %1080 = vmatpush1.bf16.msra.mxu0 0
        %1081 = vmatprep.subr.bf16.mxu0 0
        %1082 = vmatpush1.bf16.msra.mxu0 0
        %1083 = vmatprep.subr.bf16.mxu0 0
        %1084 = vmatpush1.bf16.msra.mxu0 0
        %1085 = vmatprep.subr.bf16.mxu0 0
        %1086 = vmatpush1.bf16.msra.mxu0 0
        %1087 = vmatprep.subr.bf16.mxu0 0
        %1088 = vmatpush1.bf16.msra.mxu0 0
        %1089 = vmatprep.subr.bf16.mxu0 0
        %1090 = vmatpush1.bf16.msra.mxu0 0
        %1091 = vmatprep.subr.bf16.mxu0 0
        %1092 = vmatpush1.bf16.msra.mxu0 0
        %1093 = vmatprep.subr.bf16.mxu0 0
        %1094 = vmatpush1.bf16.msra.mxu0 0
        %1095 = vmatprep.subr.bf16.mxu0 0
        %1096 = vmatpush1.bf16.msra.mxu0 0
        %1097 = vmatprep.subr.bf16.mxu0 0
        %1098 = vmatpush1.bf16.msra.mxu0 0
        %1099 = vmatprep.subr.bf16.mxu0 0
        %1100 = vmatpush1.bf16.msra.mxu0 0
        %1101 = vmatprep.subr.bf16.mxu0 0
        %1102 = vmatpush1.bf16.msra.mxu0 0
        %1103 = vmatprep.subr.bf16.mxu0 0
        %1104 = vmatpush1.bf16.msra.mxu0 0
        %1105 = vmatprep.mubr.bf16.mxu0 0
        %1106 = vmatmul.mubr.bf16.gmra.mrb[0].mxu0 %v1068
        %v1107 = vpop.f32.mrb[0].mxu0
        %v1108 = vadd.f32 0.0, %v1107
        %v1109 = vpop.f32.mrb[0].mxu0
        %v1110 = vpop.f32.mrb[0].mxu0
        %v1111 = vpop.f32.mrb[0].mxu0
        %1112 = vdwg.mxu0
        %v1114 = vsel %vm741, %v973, 0
        %v1117 = vsel %vm977, %v740, 0
        %1119 = vmatprep.subr.bf16.mxu0 0
        %1120 = vmatpush1.bf16.msra.mxu0 %v1117
        %1121 = vmatprep.subr.bf16.mxu0 0
        %1122 = vmatpush1.bf16.msra.mxu0 0
        %1123 = vmatprep.subr.bf16.mxu0 0
        %1124 = vmatpush1.bf16.msra.mxu0 0
        %1125 = vmatprep.subr.bf16.mxu0 0
        %1126 = vmatpush1.bf16.msra.mxu0 0
        %1127 = vmatprep.subr.bf16.mxu0 0
        %1128 = vmatpush1.bf16.msra.mxu0 0
        %1129 = vmatprep.subr.bf16.mxu0 0
        %1130 = vmatpush1.bf16.msra.mxu0 0
        %1131 = vmatprep.subr.bf16.mxu0 0
        %1132 = vmatpush1.bf16.msra.mxu0 0
        %1133 = vmatprep.subr.bf16.mxu0 0
        %1134 = vmatpush1.bf16.msra.mxu0 0
        %1135 = vmatprep.subr.bf16.mxu0 0
        %1136 = vmatpush1.bf16.msra.mxu0 0
        %1137 = vmatprep.subr.bf16.mxu0 0
        %1138 = vmatpush1.bf16.msra.mxu0 0
        %1139 = vmatprep.subr.bf16.mxu0 0
        %1140 = vmatpush1.bf16.msra.mxu0 0
        %1141 = vmatprep.subr.bf16.mxu0 0
        %1142 = vmatpush1.bf16.msra.mxu0 0
        %1143 = vmatprep.subr.bf16.mxu0 0
        %1144 = vmatpush1.bf16.msra.mxu0 0
        %1145 = vmatprep.subr.bf16.mxu0 0
        %1146 = vmatpush1.bf16.msra.mxu0 0
        %1147 = vmatprep.subr.bf16.mxu0 0
        %1148 = vmatpush1.bf16.msra.mxu0 0
        %1149 = vmatprep.subr.bf16.mxu0 0
        %1150 = vmatpush1.bf16.msra.mxu0 0
        %1151 = vmatprep.mubr.bf16.mxu0 0
        %1152 = vmatmul.mubr.bf16.gmra.mrb[0].mxu0 %v1114
        %v1153 = vpop.f32.mrb[0].mxu0
        %v1154 = vadd.f32 0.0, %v1153
        %v1155 = vpop.f32.mrb[0].mxu0
        %v1156 = vpop.f32.mrb[0].mxu0
        %v1157 = vpop.f32.mrb[0].mxu0
        %1158 = vdwg.mxu0
        %v1159 = vpack.c.bf16 %v1016, %v1016
        %v1160 = vpack.c.bf16 %v1062, %v1062
        %v1161 = vpack.c.bf16 %v1108, %v1108
        %v1162 = vpack.c.bf16 %v1154, %v1154
        %v1163 = vld [vmem:[%s2] sm:$0xff]
        %v1164 = vld [vmem:[%s2 + $0x8] sm:$0xff]
        %v1165 = vld [vmem:[%s2 + $0x10] sm:$0xff]
        %v1166 = vld [vmem:[%s2 + $0x18] sm:$0xff]
        %v1167 = vpack.c.bf16 %v1163, %v1163
        %v1168 = vpack.c.bf16 %v1164, %v1164
        %v1169 = vpack.c.bf16 %v1165, %v1165
        %v1170 = vpack.c.bf16 %v1166, %v1166
        %v1172 = vsel %vm741, %v1159, 0
        %v1175 = vsel %vm977, %v1167, 0
        %1177 = vmatprep.subr.bf16.mxu0 0
        %1178 = vmatpush1.bf16.msra.mxu0 %v1175
        %1179 = vmatprep.subr.bf16.mxu0 0
        %1180 = vmatpush1.bf16.msra.mxu0 0
        %1181 = vmatprep.subr.bf16.mxu0 0
        %1182 = vmatpush1.bf16.msra.mxu0 0
        %1183 = vmatprep.subr.bf16.mxu0 0
        %1184 = vmatpush1.bf16.msra.mxu0 0
        %1185 = vmatprep.subr.bf16.mxu0 0
        %1186 = vmatpush1.bf16.msra.mxu0 0
        %1187 = vmatprep.subr.bf16.mxu0 0
        %1188 = vmatpush1.bf16.msra.mxu0 0
        %1189 = vmatprep.subr.bf16.mxu0 0
        %1190 = vmatpush1.bf16.msra.mxu0 0
        %1191 = vmatprep.subr.bf16.mxu0 0
        %1192 = vmatpush1.bf16.msra.mxu0 0
        %1193 = vmatprep.subr.bf16.mxu0 0
        %1194 = vmatpush1.bf16.msra.mxu0 0
        %1195 = vmatprep.subr.bf16.mxu0 0
        %1196 = vmatpush1.bf16.msra.mxu0 0
        %1197 = vmatprep.subr.bf16.mxu0 0
        %1198 = vmatpush1.bf16.msra.mxu0 0
        %1199 = vmatprep.subr.bf16.mxu0 0
        %1200 = vmatpush1.bf16.msra.mxu0 0
        %1201 = vmatprep.subr.bf16.mxu0 0
        %1202 = vmatpush1.bf16.msra.mxu0 0
        %1203 = vmatprep.subr.bf16.mxu0 0
        %1204 = vmatpush1.bf16.msra.mxu0 0
        %1205 = vmatprep.subr.bf16.mxu0 0
        %1206 = vmatpush1.bf16.msra.mxu0 0
        %1207 = vmatprep.subr.bf16.mxu0 0
        %1208 = vmatpush1.bf16.msra.mxu0 0
        %1209 = vmatprep.mubr.bf16.mxu0 0
        %1210 = vmatmul.mubr.bf16.gmra.mrb[0].mxu0 %v1172
        %v1211 = vpop.f32.mrb[0].mxu0
        %v1212 = vadd.f32 0.0, %v1211
        %v1213 = vpop.f32.mrb[0].mxu0
        %v1214 = vpop.f32.mrb[0].mxu0
        %v1215 = vpop.f32.mrb[0].mxu0
        %1216 = vdwg.mxu0
        %v1218 = vsel %vm741, %v1160, 0
        %v1221 = vsel %vm977, %v1168, 0
        %1223 = vmatprep.subr.bf16.mxu0 0
        %1224 = vmatpush1.bf16.msra.mxu0 %v1221
        %1225 = vmatprep.subr.bf16.mxu0 0
        %1226 = vmatpush1.bf16.msra.mxu0 0
        %1227 = vmatprep.subr.bf16.mxu0 0
        %1228 = vmatpush1.bf16.msra.mxu0 0
        %1229 = vmatprep.subr.bf16.mxu0 0
        %1230 = vmatpush1.bf16.msra.mxu0 0
        %1231 = vmatprep.subr.bf16.mxu0 0
        %1232 = vmatpush1.bf16.msra.mxu0 0
        %1233 = vmatprep.subr.bf16.mxu0 0
        %1234 = vmatpush1.bf16.msra.mxu0 0
        %1235 = vmatprep.subr.bf16.mxu0 0
        %1236 = vmatpush1.bf16.msra.mxu0 0
        %1237 = vmatprep.subr.bf16.mxu0 0
        %1238 = vmatpush1.bf16.msra.mxu0 0
        %1239 = vmatprep.subr.bf16.mxu0 0
        %1240 = vmatpush1.bf16.msra.mxu0 0
        %1241 = vmatprep.subr.bf16.mxu0 0
        %1242 = vmatpush1.bf16.msra.mxu0 0
        %1243 = vmatprep.subr.bf16.mxu0 0
        %1244 = vmatpush1.bf16.msra.mxu0 0
        %1245 = vmatprep.subr.bf16.mxu0 0
        %1246 = vmatpush1.bf16.msra.mxu0 0
        %1247 = vmatprep.subr.bf16.mxu0 0
        %1248 = vmatpush1.bf16.msra.mxu0 0
        %1249 = vmatprep.subr.bf16.mxu0 0
        %1250 = vmatpush1.bf16.msra.mxu0 0
        %1251 = vmatprep.subr.bf16.mxu0 0
        %1252 = vmatpush1.bf16.msra.mxu0 0
        %1253 = vmatprep.subr.bf16.mxu0 0
        %1254 = vmatpush1.bf16.msra.mxu0 0
        %1255 = vmatprep.mubr.bf16.mxu0 0
        %1256 = vmatmul.mubr.bf16.gmra.mrb[0].mxu0 %v1218
        %v1257 = vpop.f32.mrb[0].mxu0
        %v1258 = vadd.f32 0.0, %v1257
        %v1259 = vpop.f32.mrb[0].mxu0
        %v1260 = vpop.f32.mrb[0].mxu0
        %v1261 = vpop.f32.mrb[0].mxu0
        %1262 = vdwg.mxu0
        %v1264 = vsel %vm741, %v1161, 0
        %v1267 = vsel %vm977, %v1169, 0
        %1269 = vmatprep.subr.bf16.mxu0 0
        %1270 = vmatpush1.bf16.msra.mxu0 %v1267
        %1271 = vmatprep.subr.bf16.mxu0 0
        %1272 = vmatpush1.bf16.msra.mxu0 0
        %1273 = vmatprep.subr.bf16.mxu0 0
        %1274 = vmatpush1.bf16.msra.mxu0 0
        %1275 = vmatprep.subr.bf16.mxu0 0
        %1276 = vmatpush1.bf16.msra.mxu0 0
        %1277 = vmatprep.subr.bf16.mxu0 0
        %1278 = vmatpush1.bf16.msra.mxu0 0
        %1279 = vmatprep.subr.bf16.mxu0 0
        %1280 = vmatpush1.bf16.msra.mxu0 0
        %1281 = vmatprep.subr.bf16.mxu0 0
        %1282 = vmatpush1.bf16.msra.mxu0 0
        %1283 = vmatprep.subr.bf16.mxu0 0
        %1284 = vmatpush1.bf16.msra.mxu0 0
        %1285 = vmatprep.subr.bf16.mxu0 0
        %1286 = vmatpush1.bf16.msra.mxu0 0
        %1287 = vmatprep.subr.bf16.mxu0 0
        %1288 = vmatpush1.bf16.msra.mxu0 0
        %1289 = vmatprep.subr.bf16.mxu0 0
        %1290 = vmatpush1.bf16.msra.mxu0 0
        %1291 = vmatprep.subr.bf16.mxu0 0
        %1292 = vmatpush1.bf16.msra.mxu0 0
        %1293 = vmatprep.subr.bf16.mxu0 0
        %1294 = vmatpush1.bf16.msra.mxu0 0
        %1295 = vmatprep.subr.bf16.mxu0 0
        %1296 = vmatpush1.bf16.msra.mxu0 0
        %1297 = vmatprep.subr.bf16.mxu0 0
        %1298 = vmatpush1.bf16.msra.mxu0 0
        %1299 = vmatprep.subr.bf16.mxu0 0
        %1300 = vmatpush1.bf16.msra.mxu0 0
        %1301 = vmatprep.mubr.bf16.mxu0 0
        %1302 = vmatmul.mubr.bf16.gmra.mrb[0].mxu0 %v1264
        %v1303 = vpop.f32.mrb[0].mxu0
        %v1304 = vadd.f32 0.0, %v1303
        %v1305 = vpop.f32.mrb[0].mxu0
        %v1306 = vpop.f32.mrb[0].mxu0
        %v1307 = vpop.f32.mrb[0].mxu0
        %1308 = vdwg.mxu0
        %v1310 = vsel %vm741, %v1162, 0
        %v1313 = vsel %vm977, %v1170, 0
        %1315 = vmatprep.subr.bf16.mxu0 0
        %1316 = vmatpush1.bf16.msra.mxu0 %v1313
        %1317 = vmatprep.subr.bf16.mxu0 0
        %1318 = vmatpush1.bf16.msra.mxu0 0
        %1319 = vmatprep.subr.bf16.mxu0 0
        %1320 = vmatpush1.bf16.msra.mxu0 0
        %1321 = vmatprep.subr.bf16.mxu0 0
        %1322 = vmatpush1.bf16.msra.mxu0 0
        %1323 = vmatprep.subr.bf16.mxu0 0
        %1324 = vmatpush1.bf16.msra.mxu0 0
        %1325 = vmatprep.subr.bf16.mxu0 0
        %1326 = vmatpush1.bf16.msra.mxu0 0
        %1327 = vmatprep.subr.bf16.mxu0 0
        %1328 = vmatpush1.bf16.msra.mxu0 0
        %1329 = vmatprep.subr.bf16.mxu0 0
        %1330 = vmatpush1.bf16.msra.mxu0 0
        %1331 = vmatprep.subr.bf16.mxu0 0
        %1332 = vmatpush1.bf16.msra.mxu0 0
        %1333 = vmatprep.subr.bf16.mxu0 0
        %1334 = vmatpush1.bf16.msra.mxu0 0
        %1335 = vmatprep.subr.bf16.mxu0 0
        %1336 = vmatpush1.bf16.msra.mxu0 0
        %1337 = vmatprep.subr.bf16.mxu0 0
        %1338 = vmatpush1.bf16.msra.mxu0 0
        %1339 = vmatprep.subr.bf16.mxu0 0
        %1340 = vmatpush1.bf16.msra.mxu0 0
        %1341 = vmatprep.subr.bf16.mxu0 0
        %1342 = vmatpush1.bf16.msra.mxu0 0
        %1343 = vmatprep.subr.bf16.mxu0 0
        %1344 = vmatpush1.bf16.msra.mxu0 0
        %1345 = vmatprep.subr.bf16.mxu0 0
        %1346 = vmatpush1.bf16.msra.mxu0 0
        %1347 = vmatprep.mubr.bf16.mxu0 0
        %1348 = vmatmul.mubr.bf16.gmra.mrb[0].mxu0 %v1310
        %v1349 = vpop.f32.mrb[0].mxu0
        %v1350 = vadd.f32 0.0, %v1349
        %v1351 = vpop.f32.mrb[0].mxu0
        %v1352 = vpop.f32.mrb[0].mxu0
        %v1353 = vpop.f32.mrb[0].mxu0
        %1354 = vdwg.mxu0
        %v1355 = vsel %vm241, %v1212, 0.0
        %v1356 = vsel %vm241, %v1258, 0.0
        %v1357 = vadd.f32 %v1355, %v1356
        %v1358 = vsel %vm241, %v1304, 0.0
        %v1359 = vadd.f32 %v1357, %v1358
        %v1360 = vsel %vm241, %v1350, 0.0
        %v1361 = vadd.f32 %v1359, %v1360
        %1362 = vst.msk [vmem:[%s161] sm:$0xff] %vm241, %v1361
        %s1363 = sand.u32 %s93, 1
        %s1364 = scalar_lea.sflag [#allocation3], %s1363
        %s1365 = sand.u32 %s93, 1
        %s1366 = smul.addr %s1365, 8
        %s1367 = scalar_lea.vmem [#allocation2], %s1366
        // Predicated region
        $region33: #{tpu_custom_call.1} parent=31 // pred_check
          %p1368 = pneg %p103
        $region34: #{tpu_custom_call.1} parent=31 // pred_check_branch
          %1370 = sbr.rel (%p1368) target = $region36
        $region35: #{tpu_custom_call.1} parent=31 // pred_region
          %s1372 = ssub.s32 128, 128
          %1373 = vsyncadd %s1364, %s1372
          %s1374 = smul.addr %s17, 128
          %s1375 = scalar_lea.hbm %s3, %s1374
          %s1377 = sshll.u32 %s1367, 4
          %s1378 = int_to_ptr.vmem [resolvable:$true] %s1377
          %1380 = dma.vmem_to_hbm [thread:$0]  %s1378, 128, %s1375, %s1364
        $region36: #{tpu_custom_call.1} parent=31 // pred_fallthru
          _
      $region32: #{tpu_custom_call.1} parent=5 // pred_fallthru
        _
      %p1381 = scmp.le.s32.totalorder 2, %s12
      // Predicated region
      $region37: #{tpu_custom_call.1} parent=5 // pred_check
        %p1382 = pneg %p1381
      $region38: #{tpu_custom_call.1} parent=5 // pred_check_branch
        %1384 = sbr.rel (%p1382) target = $region40
      $region39: #{tpu_custom_call.1} parent=5 // pred_region
        %s1385 = ssub.s32 %s12, 2
        // Predicated region
        $region41: #{tpu_custom_call.1} parent=39 // pred_check
          %p1386 = pneg %p109
        $region42: #{tpu_custom_call.1} parent=39 // pred_check_branch
          %1388 = sbr.rel (%p1386) target = $region44
        $region43: #{tpu_custom_call.1} parent=39 // pred_region
          %s1389 = sand.u32 %s94, 1
          %s1390 = scalar_lea.sflag [#allocation3], %s1389
          %s1391 = sand.u32 %s94, 1
          %s1392 = smul.addr %s1391, 8
          %s1393 = scalar_lea.vmem [#allocation2], %s1392
          %1394 = dma.done %s1390, 128
        $region44: #{tpu_custom_call.1} parent=39 // pred_fallthru
          _
      $region40: #{tpu_custom_call.1} parent=5 // pred_fallthru
        _
    $region6: #{tpu_custom_call.1} parent=1 // loop_footer
      %s16 = sadd.s32 1, %s12
    $region7: #{tpu_custom_call.1} parent=1 // loop_footer_branch
      %11 = sbr.rel target = $region3
    $region8: #{tpu_custom_call.1} parent=1 // loop_exit
      _
    %1395 = vsyncpa [#allocation3], 1
    %s1396 = scalar_lea.sflag [#allocation3], 1
    %1397 = vsyncpa %s1396, 1

</llo_original>
